<compile_context>
chip_gen: v6e
topology: v6e:2x2x1
jax: 0.10.0
libtpu: 0.0.40
codegen_flags: <defaults>
</compile_context>

<pallas_src>
import functools

import numpy as np
import jax
import jax.numpy as jnp
from jax.experimental import pallas as pl
from jax.experimental.pallas import tpu as pltpu


def _lstm_kernel(Bp, T, Hp, x_ref, wih_t_ref, whh_t_ref, b_ref,
                 fcw_t_ref, fcb_ref, o_ref):
    """Fused single-layer LSTM (last hidden state) + Linear.

    x_ref     : (T*Bp, D)   bf16, time-major flattened, batch-padded input
    wih_t_ref : (D, 4Hp)    bf16, gate-padded, i/f/o rows pre-scaled by 0.5
    whh_t_ref : (Hp, 4Hp)   f32,  gate-padded, padded contraction rows zeroed
    b_ref     : (1, 4Hp)    f32,  (b_ih+b_hh), gate-padded & pre-scaled
    fcw_t_ref : (Hp, O)     f32,  padded contraction rows zeroed
    fcb_ref   : (1, O)      f32
    o_ref     : (Bp, O)     f32
    """
    # Bulk input projection for every timestep in one bf16 MXU call,
    # accumulated in f32: (T*Bp, D) @ (D, 4Hp) -> (T*Bp, 4Hp).
    xg = jnp.dot(x_ref[...], wih_t_ref[...],
                 preferred_element_type=jnp.float32) + b_ref[...]

    whh_t = whh_t_ref[...]
    h = jnp.zeros((Bp, Hp), jnp.float32)
    c = jnp.zeros((Bp, Hp), jnp.float32)

    # Short, fixed trip count -> static unroll (h/c stay in vregs, scheduler
    # gets full visibility). All slice starts below are multiples of 8 (rows)
    # and 128 (lanes), so no relayout lands on the serial critical path.
    for t in range(T):
        g = xg[t * Bp:(t + 1) * Bp, :] + jnp.dot(
            h, whh_t, preferred_element_type=jnp.float32)
        # Single full-width tanh per step. The i/f/o gate columns were
        # pre-scaled by 0.5 in the wrapper, so sigmoid(z) = 0.5*tanh(z/2)+0.5
        # (exact identity) falls out of the same EUP pass as the g-gate tanh.
        a = jnp.tanh(g)
        i_g = 0.5 * a[:, 0 * Hp:1 * Hp] + 0.5
        f_g = 0.5 * a[:, 1 * Hp:2 * Hp] + 0.5
        g_g = a[:, 2 * Hp:3 * Hp]
        o_g = 0.5 * a[:, 3 * Hp:4 * Hp] + 0.5
        c = f_g * c + i_g * g_g
        h = o_g * jnp.tanh(c)
        # Padded lanes stay exactly 0 in h/c (pre-activation 0 -> i=f=o=0.5,
        # g=0), and the padded contraction rows of whh_t / fcw_t are zero, so
        # padding can never leak into the live lanes.

    # Final linear layer on the last hidden state, fused into the same kernel.
    o_ref[...] = jnp.dot(h, fcw_t_ref[...],
                         preferred_element_type=jnp.float32) + fcb_ref[...]


def _vmem_spec():
    return pl.BlockSpec(memory_space=pltpu.MemorySpace.VMEM)


def _round_up(x, m):
    return (x + m - 1) // m * m


def ram_lstm_forward(x, params):
    """x: (B, T, D) float32, batch_first like the PyTorch module."""
    B, T, D = x.shape
    H = params["whh"].shape[1]
    O = params["fc_w"].shape[0]

    Hp = _round_up(H, 128)   # lane-aligned per-gate column width
    Bp = _round_up(B, 8)     # sublane-aligned per-timestep row block

    # sigmoid(z) = 0.5*tanh(z/2) + 0.5 (exact): fold the 0.5 pre-scale of the
    # i/f/o gates (PyTorch gate order i, f, g, o) into the weights and bias.
    gate_scale = jnp.array([0.5, 0.5, 1.0, 0.5], jnp.float32)

    def pad_gates(w, ncols_src, ncols_dst):
        # (4H, ncols_src) -> (4Hp, ncols_dst), zero-filled padding, gate-scaled.
        w4 = w.reshape(4, H, ncols_src) * gate_scale[:, None, None]
        wp = jnp.zeros((4, Hp, ncols_dst), jnp.float32)
        wp = wp.at[:, :H, :ncols_src].set(w4)
        return wp.reshape(4 * Hp, ncols_dst)

    # One-time wrapper-side padding + transposes (tiny arrays, free vs. the
    # serial recurrence) so every in-kernel dot is a clean (M,K)x(K,N) matmul.
    wih_t = pad_gates(params["wih"], D, D).T.astype(jnp.bfloat16)   # (D, 4Hp)
    whh_t = pad_gates(params["whh"], H, Hp).T                       # (Hp, 4Hp)
    b = (params["b_ih"] + params["b_hh"]).reshape(4, H) * gate_scale[:, None]
    b_p = jnp.zeros((4, Hp), jnp.float32).at[:, :H].set(b).reshape(1, 4 * Hp)
    fcw_t = jnp.zeros((Hp, O), jnp.float32).at[:H, :].set(params["fc_w"].T)
    fcb = params["fc_b"].reshape(1, O).astype(jnp.float32)

    # Layout plumbing only: batch-pad to a multiple of 8, time-major flatten so
    # each timestep is one contiguous sublane-aligned row block, bf16 the bulk
    # projection operand (accumulation stays f32 inside the kernel).
    x_p = jnp.zeros((Bp, T, D), x.dtype).at[:B].set(x)
    x_tm = jnp.transpose(x_p, (1, 0, 2)).reshape(T * Bp, D).astype(jnp.bfloat16)

    # Explicit VMEM budget with headroom (everything here is far below the
    # default scoped limit; matters once T/B grow, esp. on v7x's 64 MiB VMEM).
    est = (T * Bp * D * 2 + D * 4 * Hp * 2              # x_tm, wih_t (bf16)
           + Hp * 4 * Hp * 4 + 4 * Hp * 4               # whh_t, bias
           + Hp * O * 4 + O * 4 + Bp * O * 4            # fc weights, out
           + T * Bp * 4 * Hp * 4                        # xg intermediate
           + 8 * Bp * 4 * Hp * 4)                       # per-step temporaries
    vmem_bytes = int(min(32 << 20, max(8 << 20, 3 * est)))

    kernel = functools.partial(_lstm_kernel, Bp, T, Hp)
    out = pl.pallas_call(
        kernel,
        out_shape=jax.ShapeDtypeStruct((Bp, O), jnp.float32),
        in_specs=[_vmem_spec() for _ in range(6)],
        out_specs=_vmem_spec(),
        compiler_params=pltpu.CompilerParams(vmem_limit_bytes=vmem_bytes),
    )(x_tm, wih_t, whh_t, b_p, fcw_t, fcb)
    return out[:B]


def init_params(key, input_size=1000, hidden_size=100, out_size=2):
    """PyTorch-style init: U(-1/sqrt(H), 1/sqrt(H)) for LSTM and Linear."""
    ks = jax.random.split(key, 6)
    bound = 1.0 / np.sqrt(hidden_size)

    def u(k, shape):
        return jax.random.uniform(k, shape, jnp.float32, -bound, bound)

    return {
        "wih": u(ks[0], (4 * hidden_size, input_size)),
        "whh": u(ks[1], (4 * hidden_size, hidden_size)),
        "b_ih": u(ks[2], (4 * hidden_size,)),
        "b_hh": u(ks[3], (4 * hidden_size,)),
        "fc_w": u(ks[4], (out_size, hidden_size)),
        "fc_b": u(ks[5], (out_size,)),
    }


def reference_forward(x, p):
    """Pure-JAX f32 reference matching the PyTorch forward."""
    B, T, _ = x.shape
    H = p["whh"].shape[1]
    h = jnp.zeros((B, H), jnp.float32)
    c = jnp.zeros((B, H), jnp.float32)
    for t in range(T):
        g = (x[:, t, :] @ p["wih"].T + p["b_ih"]
             + h @ p["whh"].T + p["b_hh"])
        i_g = jax.nn.sigmoid(g[:, 0 * H:1 * H])
        f_g = jax.nn.sigmoid(g[:, 1 * H:2 * H])
        g_g = jnp.tanh(g[:, 2 * H:3 * H])
        o_g = jax.nn.sigmoid(g[:, 3 * H:4 * H])
        c = f_g * c + i_g * g_g
        h = o_g * jnp.tanh(c)
    return h @ p["fc_w"].T + p["fc_b"]


if __name__ == "__main__":
    # Small shapes consistent with the module (batch_first sequence input).
    B, T, D, H, O = 8, 8, 64, 32, 2
    kx, kp = jax.random.split(jax.random.PRNGKey(0))
    x = jax.random.normal(kx, (B, T, D), jnp.float32)
    params = init_params(kp, input_size=D, hidden_size=H, out_size=O)

    out = jax.jit(ram_lstm_forward)(x, params)
    out = jax.block_until_ready(out)

    ref = reference_forward(x, params)
    out_np, ref_np = np.asarray(out), np.asarray(ref)
    if not np.allclose(out_np, ref_np, atol=1e-2, rtol=1e-2):
        diff = np.max(np.abs(out_np - ref_np))
        raise SystemExit(f"mismatch vs reference, max abs diff = {diff}")
    print("KERNEL_OK")
</pallas_src>

<mosaic_0001>
module attributes {stable_mosaic.version = 11 : i64} {
  func.func @_lstm_kernel(%arg0: memref<64x64xbf16, #tpu.memory_space<vmem>>, %arg1: memref<64x512xbf16, #tpu.memory_space<vmem>>, %arg2: memref<128x512xf32, #tpu.memory_space<vmem>>, %arg3: memref<1x512xf32, #tpu.memory_space<vmem>>, %arg4: memref<128x2xf32, #tpu.memory_space<vmem>>, %arg5: memref<1x2xf32, #tpu.memory_space<vmem>>, %arg6: memref<8x2xf32, #tpu.memory_space<vmem>>) attributes {dimension_semantics = [], scalar_prefetch = 0 : i64, scratch_operands = 0 : i64, tpu.core_type = #tpu.core_type<tc>} {
    %c0 = arith.constant 0 : index
    %c0_0 = arith.constant 0 : index
    %0 = vector.load %arg0[%c0, %c0_0] : memref<64x64xbf16, #tpu.memory_space<vmem>>, vector<64x64xbf16>
    %c0_1 = arith.constant 0 : index
    %c0_2 = arith.constant 0 : index
    %1 = vector.load %arg1[%c0_1, %c0_2] : memref<64x512xbf16, #tpu.memory_space<vmem>>, vector<64x512xbf16>
    %cst = arith.constant dense<0.000000e+00> : vector<64x512xf32>
    %2 = tpu.matmul %0, %1, %cst {dimension_numbers = #tpu.dot_dimension_numbers<[1], [0], [0], [1], [0, 0, 1, 1], [], []>} : vector<64x64xbf16>, vector<64x512xbf16>, vector<64x512xf32> -> vector<64x512xf32>
    %c0_3 = arith.constant 0 : index
    %c0_4 = arith.constant 0 : index
    %3 = vector.load %arg3[%c0_3, %c0_4] : memref<1x512xf32, #tpu.memory_space<vmem>>, vector<1x512xf32>
    %4 = vector.broadcast %3 : vector<1x512xf32> to vector<64x512xf32>
    %5 = arith.addf %2, %4 : vector<64x512xf32>
    %c0_5 = arith.constant 0 : index
    %c0_6 = arith.constant 0 : index
    %6 = vector.load %arg2[%c0_5, %c0_6] : memref<128x512xf32, #tpu.memory_space<vmem>>, vector<128x512xf32>
    %cst_7 = arith.constant 0.000000e+00 : f32
    %7 = vector.broadcast %cst_7 : f32 to vector<8x128xf32>
    %cst_8 = arith.constant 0.000000e+00 : f32
    %8 = vector.broadcast %cst_8 : f32 to vector<8x128xf32>
    %9 = vector.extract_strided_slice %5 {offsets = [0, 0], sizes = [8, 512], strides = [1, 1]} : vector<64x512xf32> to vector<8x512xf32>
    %cst_9 = arith.constant dense<0.000000e+00> : vector<8x512xf32>
    %10 = tpu.matmul %7, %6, %cst_9 {dimension_numbers = #tpu.dot_dimension_numbers<[1], [0], [0], [1], [0, 0, 1, 1], [], []>} : vector<8x128xf32>, vector<128x512xf32>, vector<8x512xf32> -> vector<8x512xf32>
    %11 = arith.addf %9, %10 : vector<8x512xf32>
    %12 = math.tanh %11 : vector<8x512xf32>
    %13 = vector.extract_strided_slice %12 {offsets = [0, 0], sizes = [8, 128], strides = [1, 1]} : vector<8x512xf32> to vector<8x128xf32>
    %cst_10 = arith.constant 5.000000e-01 : f32
    %14 = vector.broadcast %cst_10 : f32 to vector<8x128xf32>
    %15 = arith.mulf %14, %13 : vector<8x128xf32>
    %cst_11 = arith.constant 5.000000e-01 : f32
    %16 = vector.broadcast %cst_11 : f32 to vector<8x128xf32>
    %17 = arith.addf %15, %16 : vector<8x128xf32>
    %18 = vector.extract_strided_slice %12 {offsets = [0, 128], sizes = [8, 128], strides = [1, 1]} : vector<8x512xf32> to vector<8x128xf32>
    %cst_12 = arith.constant 5.000000e-01 : f32
    %19 = vector.broadcast %cst_12 : f32 to vector<8x128xf32>
    %20 = arith.mulf %19, %18 : vector<8x128xf32>
    %cst_13 = arith.constant 5.000000e-01 : f32
    %21 = vector.broadcast %cst_13 : f32 to vector<8x128xf32>
    %22 = arith.addf %20, %21 : vector<8x128xf32>
    %23 = vector.extract_strided_slice %12 {offsets = [0, 256], sizes = [8, 128], strides = [1, 1]} : vector<8x512xf32> to vector<8x128xf32>
    %24 = vector.extract_strided_slice %12 {offsets = [0, 384], sizes = [8, 128], strides = [1, 1]} : vector<8x512xf32> to vector<8x128xf32>
    %cst_14 = arith.constant 5.000000e-01 : f32
    %25 = vector.broadcast %cst_14 : f32 to vector<8x128xf32>
    %26 = arith.mulf %25, %24 : vector<8x128xf32>
    %cst_15 = arith.constant 5.000000e-01 : f32
    %27 = vector.broadcast %cst_15 : f32 to vector<8x128xf32>
    %28 = arith.addf %26, %27 : vector<8x128xf32>
    %29 = arith.mulf %22, %8 : vector<8x128xf32>
    %30 = arith.mulf %17, %23 : vector<8x128xf32>
    %31 = arith.addf %29, %30 : vector<8x128xf32>
    %32 = math.tanh %31 : vector<8x128xf32>
    %33 = arith.mulf %28, %32 : vector<8x128xf32>
    %34 = vector.extract_strided_slice %5 {offsets = [8, 0], sizes = [8, 512], strides = [1, 1]} : vector<64x512xf32> to vector<8x512xf32>
    %cst_16 = arith.constant dense<0.000000e+00> : vector<8x512xf32>
    %35 = tpu.matmul %33, %6, %cst_16 {dimension_numbers = #tpu.dot_dimension_numbers<[1], [0], [0], [1], [0, 0, 1, 1], [], []>} : vector<8x128xf32>, vector<128x512xf32>, vector<8x512xf32> -> vector<8x512xf32>
    %36 = arith.addf %34, %35 : vector<8x512xf32>
    %37 = math.tanh %36 : vector<8x512xf32>
    %38 = vector.extract_strided_slice %37 {offsets = [0, 0], sizes = [8, 128], strides = [1, 1]} : vector<8x512xf32> to vector<8x128xf32>
    %cst_17 = arith.constant 5.000000e-01 : f32
    %39 = vector.broadcast %cst_17 : f32 to vector<8x128xf32>
    %40 = arith.mulf %39, %38 : vector<8x128xf32>
    %cst_18 = arith.constant 5.000000e-01 : f32
    %41 = vector.broadcast %cst_18 : f32 to vector<8x128xf32>
    %42 = arith.addf %40, %41 : vector<8x128xf32>
    %43 = vector.extract_strided_slice %37 {offsets = [0, 128], sizes = [8, 128], strides = [1, 1]} : vector<8x512xf32> to vector<8x128xf32>
    %cst_19 = arith.constant 5.000000e-01 : f32
    %44 = vector.broadcast %cst_19 : f32 to vector<8x128xf32>
    %45 = arith.mulf %44, %43 : vector<8x128xf32>
    %cst_20 = arith.constant 5.000000e-01 : f32
    %46 = vector.broadcast %cst_20 : f32 to vector<8x128xf32>
    %47 = arith.addf %45, %46 : vector<8x128xf32>
    %48 = vector.extract_strided_slice %37 {offsets = [0, 256], sizes = [8, 128], strides = [1, 1]} : vector<8x512xf32> to vector<8x128xf32>
    %49 = vector.extract_strided_slice %37 {offsets = [0, 384], sizes = [8, 128], strides = [1, 1]} : vector<8x512xf32> to vector<8x128xf32>
    %cst_21 = arith.constant 5.000000e-01 : f32
    %50 = vector.broadcast %cst_21 : f32 to vector<8x128xf32>
    %51 = arith.mulf %50, %49 : vector<8x128xf32>
    %cst_22 = arith.constant 5.000000e-01 : f32
    %52 = vector.broadcast %cst_22 : f32 to vector<8x128xf32>
    %53 = arith.addf %51, %52 : vector<8x128xf32>
    %54 = arith.mulf %47, %31 : vector<8x128xf32>
    %55 = arith.mulf %42, %48 : vector<8x128xf32>
    %56 = arith.addf %54, %55 : vector<8x128xf32>
    %57 = math.tanh %56 : vector<8x128xf32>
    %58 = arith.mulf %53, %57 : vector<8x128xf32>
    %59 = vector.extract_strided_slice %5 {offsets = [16, 0], sizes = [8, 512], strides = [1, 1]} : vector<64x512xf32> to vector<8x512xf32>
    %cst_23 = arith.constant dense<0.000000e+00> : vector<8x512xf32>
    %60 = tpu.matmul %58, %6, %cst_23 {dimension_numbers = #tpu.dot_dimension_numbers<[1], [0], [0], [1], [0, 0, 1, 1], [], []>} : vector<8x128xf32>, vector<128x512xf32>, vector<8x512xf32> -> vector<8x512xf32>
    %61 = arith.addf %59, %60 : vector<8x512xf32>
    %62 = math.tanh %61 : vector<8x512xf32>
    %63 = vector.extract_strided_slice %62 {offsets = [0, 0], sizes = [8, 128], strides = [1, 1]} : vector<8x512xf32> to vector<8x128xf32>
    %cst_24 = arith.constant 5.000000e-01 : f32
    %64 = vector.broadcast %cst_24 : f32 to vector<8x128xf32>
    %65 = arith.mulf %64, %63 : vector<8x128xf32>
    %cst_25 = arith.constant 5.000000e-01 : f32
    %66 = vector.broadcast %cst_25 : f32 to vector<8x128xf32>
    %67 = arith.addf %65, %66 : vector<8x128xf32>
    %68 = vector.extract_strided_slice %62 {offsets = [0, 128], sizes = [8, 128], strides = [1, 1]} : vector<8x512xf32> to vector<8x128xf32>
    %cst_26 = arith.constant 5.000000e-01 : f32
    %69 = vector.broadcast %cst_26 : f32 to vector<8x128xf32>
    %70 = arith.mulf %69, %68 : vector<8x128xf32>
    %cst_27 = arith.constant 5.000000e-01 : f32
    %71 = vector.broadcast %cst_27 : f32 to vector<8x128xf32>
    %72 = arith.addf %70, %71 : vector<8x128xf32>
    %73 = vector.extract_strided_slice %62 {offsets = [0, 256], sizes = [8, 128], strides = [1, 1]} : vector<8x512xf32> to vector<8x128xf32>
    %74 = vector.extract_strided_slice %62 {offsets = [0, 384], sizes = [8, 128], strides = [1, 1]} : vector<8x512xf32> to vector<8x128xf32>
    %cst_28 = arith.constant 5.000000e-01 : f32
    %75 = vector.broadcast %cst_28 : f32 to vector<8x128xf32>
    %76 = arith.mulf %75, %74 : vector<8x128xf32>
    %cst_29 = arith.constant 5.000000e-01 : f32
    %77 = vector.broadcast %cst_29 : f32 to vector<8x128xf32>
    %78 = arith.addf %76, %77 : vector<8x128xf32>
    %79 = arith.mulf %72, %56 : vector<8x128xf32>
    %80 = arith.mulf %67, %73 : vector<8x128xf32>
    %81 = arith.addf %79, %80 : vector<8x128xf32>
    %82 = math.tanh %81 : vector<8x128xf32>
    %83 = arith.mulf %78, %82 : vector<8x128xf32>
    %84 = vector.extract_strided_slice %5 {offsets = [24, 0], sizes = [8, 512], strides = [1, 1]} : vector<64x512xf32> to vector<8x512xf32>
    %cst_30 = arith.constant dense<0.000000e+00> : vector<8x512xf32>
    %85 = tpu.matmul %83, %6, %cst_30 {dimension_numbers = #tpu.dot_dimension_numbers<[1], [0], [0], [1], [0, 0, 1, 1], [], []>} : vector<8x128xf32>, vector<128x512xf32>, vector<8x512xf32> -> vector<8x512xf32>
    %86 = arith.addf %84, %85 : vector<8x512xf32>
    %87 = math.tanh %86 : vector<8x512xf32>
    %88 = vector.extract_strided_slice %87 {offsets = [0, 0], sizes = [8, 128], strides = [1, 1]} : vector<8x512xf32> to vector<8x128xf32>
    %cst_31 = arith.constant 5.000000e-01 : f32
    %89 = vector.broadcast %cst_31 : f32 to vector<8x128xf32>
    %90 = arith.mulf %89, %88 : vector<8x128xf32>
    %cst_32 = arith.constant 5.000000e-01 : f32
    %91 = vector.broadcast %cst_32 : f32 to vector<8x128xf32>
    %92 = arith.addf %90, %91 : vector<8x128xf32>
    %93 = vector.extract_strided_slice %87 {offsets = [0, 128], sizes = [8, 128], strides = [1, 1]} : vector<8x512xf32> to vector<8x128xf32>
    %cst_33 = arith.constant 5.000000e-01 : f32
    %94 = vector.broadcast %cst_33 : f32 to vector<8x128xf32>
    %95 = arith.mulf %94, %93 : vector<8x128xf32>
    %cst_34 = arith.constant 5.000000e-01 : f32
    %96 = vector.broadcast %cst_34 : f32 to vector<8x128xf32>
    %97 = arith.addf %95, %96 : vector<8x128xf32>
    %98 = vector.extract_strided_slice %87 {offsets = [0, 256], sizes = [8, 128], strides = [1, 1]} : vector<8x512xf32> to vector<8x128xf32>
    %99 = vector.extract_strided_slice %87 {offsets = [0, 384], sizes = [8, 128], strides = [1, 1]} : vector<8x512xf32> to vector<8x128xf32>
    %cst_35 = arith.constant 5.000000e-01 : f32
    %100 = vector.broadcast %cst_35 : f32 to vector<8x128xf32>
    %101 = arith.mulf %100, %99 : vector<8x128xf32>
    %cst_36 = arith.constant 5.000000e-01 : f32
    %102 = vector.broadcast %cst_36 : f32 to vector<8x128xf32>
    %103 = arith.addf %101, %102 : vector<8x128xf32>
    %104 = arith.mulf %97, %81 : vector<8x128xf32>
    %105 = arith.mulf %92, %98 : vector<8x128xf32>
    %106 = arith.addf %104, %105 : vector<8x128xf32>
    %107 = math.tanh %106 : vector<8x128xf32>
    %108 = arith.mulf %103, %107 : vector<8x128xf32>
    %109 = vector.extract_strided_slice %5 {offsets = [32, 0], sizes = [8, 512], strides = [1, 1]} : vector<64x512xf32> to vector<8x512xf32>
    %cst_37 = arith.constant dense<0.000000e+00> : vector<8x512xf32>
    %110 = tpu.matmul %108, %6, %cst_37 {dimension_numbers = #tpu.dot_dimension_numbers<[1], [0], [0], [1], [0, 0, 1, 1], [], []>} : vector<8x128xf32>, vector<128x512xf32>, vector<8x512xf32> -> vector<8x512xf32>
    %111 = arith.addf %109, %110 : vector<8x512xf32>
    %112 = math.tanh %111 : vector<8x512xf32>
    %113 = vector.extract_strided_slice %112 {offsets = [0, 0], sizes = [8, 128], strides = [1, 1]} : vector<8x512xf32> to vector<8x128xf32>
    %cst_38 = arith.constant 5.000000e-01 : f32
    %114 = vector.broadcast %cst_38 : f32 to vector<8x128xf32>
    %115 = arith.mulf %114, %113 : vector<8x128xf32>
    %cst_39 = arith.constant 5.000000e-01 : f32
    %116 = vector.broadcast %cst_39 : f32 to vector<8x128xf32>
    %117 = arith.addf %115, %116 : vector<8x128xf32>
    %118 = vector.extract_strided_slice %112 {offsets = [0, 128], sizes = [8, 128], strides = [1, 1]} : vector<8x512xf32> to vector<8x128xf32>
    %cst_40 = arith.constant 5.000000e-01 : f32
    %119 = vector.broadcast %cst_40 : f32 to vector<8x128xf32>
    %120 = arith.mulf %119, %118 : vector<8x128xf32>
    %cst_41 = arith.constant 5.000000e-01 : f32
    %121 = vector.broadcast %cst_41 : f32 to vector<8x128xf32>
    %122 = arith.addf %120, %121 : vector<8x128xf32>
    %123 = vector.extract_strided_slice %112 {offsets = [0, 256], sizes = [8, 128], strides = [1, 1]} : vector<8x512xf32> to vector<8x128xf32>
    %124 = vector.extract_strided_slice %112 {offsets = [0, 384], sizes = [8, 128], strides = [1, 1]} : vector<8x512xf32> to vector<8x128xf32>
    %cst_42 = arith.constant 5.000000e-01 : f32
    %125 = vector.broadcast %cst_42 : f32 to vector<8x128xf32>
    %126 = arith.mulf %125, %124 : vector<8x128xf32>
    %cst_43 = arith.constant 5.000000e-01 : f32
    %127 = vector.broadcast %cst_43 : f32 to vector<8x128xf32>
    %128 = arith.addf %126, %127 : vector<8x128xf32>
    %129 = arith.mulf %122, %106 : vector<8x128xf32>
    %130 = arith.mulf %117, %123 : vector<8x128xf32>
    %131 = arith.addf %129, %130 : vector<8x128xf32>
    %132 = math.tanh %131 : vector<8x128xf32>
    %133 = arith.mulf %128, %132 : vector<8x128xf32>
    %134 = vector.extract_strided_slice %5 {offsets = [40, 0], sizes = [8, 512], strides = [1, 1]} : vector<64x512xf32> to vector<8x512xf32>
    %cst_44 = arith.constant dense<0.000000e+00> : vector<8x512xf32>
    %135 = tpu.matmul %133, %6, %cst_44 {dimension_numbers = #tpu.dot_dimension_numbers<[1], [0], [0], [1], [0, 0, 1, 1], [], []>} : vector<8x128xf32>, vector<128x512xf32>, vector<8x512xf32> -> vector<8x512xf32>
    %136 = arith.addf %134, %135 : vector<8x512xf32>
    %137 = math.tanh %136 : vector<8x512xf32>
    %138 = vector.extract_strided_slice %137 {offsets = [0, 0], sizes = [8, 128], strides = [1, 1]} : vector<8x512xf32> to vector<8x128xf32>
    %cst_45 = arith.constant 5.000000e-01 : f32
    %139 = vector.broadcast %cst_45 : f32 to vector<8x128xf32>
    %140 = arith.mulf %139, %138 : vector<8x128xf32>
    %cst_46 = arith.constant 5.000000e-01 : f32
    %141 = vector.broadcast %cst_46 : f32 to vector<8x128xf32>
    %142 = arith.addf %140, %141 : vector<8x128xf32>
    %143 = vector.extract_strided_slice %137 {offsets = [0, 128], sizes = [8, 128], strides = [1, 1]} : vector<8x512xf32> to vector<8x128xf32>
    %cst_47 = arith.constant 5.000000e-01 : f32
    %144 = vector.broadcast %cst_47 : f32 to vector<8x128xf32>
    %145 = arith.mulf %144, %143 : vector<8x128xf32>
    %cst_48 = arith.constant 5.000000e-01 : f32
    %146 = vector.broadcast %cst_48 : f32 to vector<8x128xf32>
    %147 = arith.addf %145, %146 : vector<8x128xf32>
    %148 = vector.extract_strided_slice %137 {offsets = [0, 256], sizes = [8, 128], strides = [1, 1]} : vector<8x512xf32> to vector<8x128xf32>
    %149 = vector.extract_strided_slice %137 {offsets = [0, 384], sizes = [8, 128], strides = [1, 1]} : vector<8x512xf32> to vector<8x128xf32>
    %cst_49 = arith.constant 5.000000e-01 : f32
    %150 = vector.broadcast %cst_49 : f32 to vector<8x128xf32>
    %151 = arith.mulf %150, %149 : vector<8x128xf32>
    %cst_50 = arith.constant 5.000000e-01 : f32
    %152 = vector.broadcast %cst_50 : f32 to vector<8x128xf32>
    %153 = arith.addf %151, %152 : vector<8x128xf32>
    %154 = arith.mulf %147, %131 : vector<8x128xf32>
    %155 = arith.mulf %142, %148 : vector<8x128xf32>
    %156 = arith.addf %154, %155 : vector<8x128xf32>
    %157 = math.tanh %156 : vector<8x128xf32>
    %158 = arith.mulf %153, %157 : vector<8x128xf32>
    %159 = vector.extract_strided_slice %5 {offsets = [48, 0], sizes = [8, 512], strides = [1, 1]} : vector<64x512xf32> to vector<8x512xf32>
    %cst_51 = arith.constant dense<0.000000e+00> : vector<8x512xf32>
    %160 = tpu.matmul %158, %6, %cst_51 {dimension_numbers = #tpu.dot_dimension_numbers<[1], [0], [0], [1], [0, 0, 1, 1], [], []>} : vector<8x128xf32>, vector<128x512xf32>, vector<8x512xf32> -> vector<8x512xf32>
    %161 = arith.addf %159, %160 : vector<8x512xf32>
    %162 = math.tanh %161 : vector<8x512xf32>
    %163 = vector.extract_strided_slice %162 {offsets = [0, 0], sizes = [8, 128], strides = [1, 1]} : vector<8x512xf32> to vector<8x128xf32>
    %cst_52 = arith.constant 5.000000e-01 : f32
    %164 = vector.broadcast %cst_52 : f32 to vector<8x128xf32>
    %165 = arith.mulf %164, %163 : vector<8x128xf32>
    %cst_53 = arith.constant 5.000000e-01 : f32
    %166 = vector.broadcast %cst_53 : f32 to vector<8x128xf32>
    %167 = arith.addf %165, %166 : vector<8x128xf32>
    %168 = vector.extract_strided_slice %162 {offsets = [0, 128], sizes = [8, 128], strides = [1, 1]} : vector<8x512xf32> to vector<8x128xf32>
    %cst_54 = arith.constant 5.000000e-01 : f32
    %169 = vector.broadcast %cst_54 : f32 to vector<8x128xf32>
    %170 = arith.mulf %169, %168 : vector<8x128xf32>
    %cst_55 = arith.constant 5.000000e-01 : f32
    %171 = vector.broadcast %cst_55 : f32 to vector<8x128xf32>
    %172 = arith.addf %170, %171 : vector<8x128xf32>
    %173 = vector.extract_strided_slice %162 {offsets = [0, 256], sizes = [8, 128], strides = [1, 1]} : vector<8x512xf32> to vector<8x128xf32>
    %174 = vector.extract_strided_slice %162 {offsets = [0, 384], sizes = [8, 128], strides = [1, 1]} : vector<8x512xf32> to vector<8x128xf32>
    %cst_56 = arith.constant 5.000000e-01 : f32
    %175 = vector.broadcast %cst_56 : f32 to vector<8x128xf32>
    %176 = arith.mulf %175, %174 : vector<8x128xf32>
    %cst_57 = arith.constant 5.000000e-01 : f32
    %177 = vector.broadcast %cst_57 : f32 to vector<8x128xf32>
    %178 = arith.addf %176, %177 : vector<8x128xf32>
    %179 = arith.mulf %172, %156 : vector<8x128xf32>
    %180 = arith.mulf %167, %173 : vector<8x128xf32>
    %181 = arith.addf %179, %180 : vector<8x128xf32>
    %182 = math.tanh %181 : vector<8x128xf32>
    %183 = arith.mulf %178, %182 : vector<8x128xf32>
    %184 = vector.extract_strided_slice %5 {offsets = [56, 0], sizes = [8, 512], strides = [1, 1]} : vector<64x512xf32> to vector<8x512xf32>
    %cst_58 = arith.constant dense<0.000000e+00> : vector<8x512xf32>
    %185 = tpu.matmul %183, %6, %cst_58 {dimension_numbers = #tpu.dot_dimension_numbers<[1], [0], [0], [1], [0, 0, 1, 1], [], []>} : vector<8x128xf32>, vector<128x512xf32>, vector<8x512xf32> -> vector<8x512xf32>
    %186 = arith.addf %184, %185 : vector<8x512xf32>
    %187 = math.tanh %186 : vector<8x512xf32>
    %188 = vector.extract_strided_slice %187 {offsets = [0, 0], sizes = [8, 128], strides = [1, 1]} : vector<8x512xf32> to vector<8x128xf32>
    %cst_59 = arith.constant 5.000000e-01 : f32
    %189 = vector.broadcast %cst_59 : f32 to vector<8x128xf32>
    %190 = arith.mulf %189, %188 : vector<8x128xf32>
    %cst_60 = arith.constant 5.000000e-01 : f32
    %191 = vector.broadcast %cst_60 : f32 to vector<8x128xf32>
    %192 = arith.addf %190, %191 : vector<8x128xf32>
    %193 = vector.extract_strided_slice %187 {offsets = [0, 128], sizes = [8, 128], strides = [1, 1]} : vector<8x512xf32> to vector<8x128xf32>
    %cst_61 = arith.constant 5.000000e-01 : f32
    %194 = vector.broadcast %cst_61 : f32 to vector<8x128xf32>
    %195 = arith.mulf %194, %193 : vector<8x128xf32>
    %cst_62 = arith.constant 5.000000e-01 : f32
    %196 = vector.broadcast %cst_62 : f32 to vector<8x128xf32>
    %197 = arith.addf %195, %196 : vector<8x128xf32>
    %198 = vector.extract_strided_slice %187 {offsets = [0, 256], sizes = [8, 128], strides = [1, 1]} : vector<8x512xf32> to vector<8x128xf32>
    %199 = vector.extract_strided_slice %187 {offsets = [0, 384], sizes = [8, 128], strides = [1, 1]} : vector<8x512xf32> to vector<8x128xf32>
    %cst_63 = arith.constant 5.000000e-01 : f32
    %200 = vector.broadcast %cst_63 : f32 to vector<8x128xf32>
    %201 = arith.mulf %200, %199 : vector<8x128xf32>
    %cst_64 = arith.constant 5.000000e-01 : f32
    %202 = vector.broadcast %cst_64 : f32 to vector<8x128xf32>
    %203 = arith.addf %201, %202 : vector<8x128xf32>
    %204 = arith.mulf %197, %181 : vector<8x128xf32>
    %205 = arith.mulf %192, %198 : vector<8x128xf32>
    %206 = arith.addf %204, %205 : vector<8x128xf32>
    %207 = math.tanh %206 : vector<8x128xf32>
    %208 = arith.mulf %203, %207 : vector<8x128xf32>
    %c0_65 = arith.constant 0 : index
    %c0_66 = arith.constant 0 : index
    %209 = vector.load %arg4[%c0_65, %c0_66] : memref<128x2xf32, #tpu.memory_space<vmem>>, vector<128x2xf32>
    %cst_67 = arith.constant dense<0.000000e+00> : vector<8x2xf32>
    %210 = tpu.matmul %208, %209, %cst_67 {dimension_numbers = #tpu.dot_dimension_numbers<[1], [0], [0], [1], [0, 0, 1, 1], [], []>} : vector<8x128xf32>, vector<128x2xf32>, vector<8x2xf32> -> vector<8x2xf32>
    %c0_68 = arith.constant 0 : index
    %c0_69 = arith.constant 0 : index
    %211 = vector.load %arg5[%c0_68, %c0_69] : memref<1x2xf32, #tpu.memory_space<vmem>>, vector<1x2xf32>
    %212 = vector.broadcast %211 : vector<1x2xf32> to vector<8x2xf32>
    %213 = arith.addf %210, %212 : vector<8x2xf32>
    %c0_70 = arith.constant 0 : index
    %c0_71 = arith.constant 0 : index
    %214 = vector.load %arg6[%c0_70, %c0_71] : memref<8x2xf32, #tpu.memory_space<vmem>>, vector<8x2xf32>
    tpu.vector_store %arg6[%c0_70, %c0_71], %213 {strides = array<i32>} : memref<8x2xf32, #tpu.memory_space<vmem>>, vector<8x2xf32>,
    return
  }
}

</mosaic_0001>

<llo_original>
// kernel: ram_lstm_forward.1
$region0: #{ram_lstm_forward.1}
  #allocation0 [shape = 'u32[]', space=smem, size = 0x4, offset = 0x4, fixed_abs, tag = 'smem constant byte address 0x4 - core index']
  #allocation1 [shape = 'u32[144,128]{1,0:T(1,128)}', space=vmem, size = 0x12000, scoped, tag = 'internal scratch']
  %s0 = inlined_call_operand.vmem [shape: bf16[64,64], index: 0, kind: input, shape index: {}]
  %s1 = inlined_call_operand.vmem [shape: bf16[64,512], index: 1, kind: input, shape index: {}]
  %s2 = inlined_call_operand.vmem [shape: f32[128,512], index: 2, kind: input, shape index: {}]
  %s3 = inlined_call_operand.vmem [shape: f32[1,512], index: 3, kind: input, shape index: {}]
  %s4 = inlined_call_operand.vmem [shape: f32[128,2], index: 4, kind: input, shape index: {}]
  %s5 = inlined_call_operand.vmem [shape: f32[1,2], index: 5, kind: input, shape index: {}]
  %s6 = inlined_call_operand.vmem [shape: f32[8,2], index: 6, kind: output, shape index: {}]
  %s7 = sld [smem:[#allocation0]]
  $region34: #{ram_lstm_forward.1} parent=0
    _
  %s9 = ssub.s32 1, %s7
  %s10 = scalar_select 0, %s9, %s7
  // Predicated region
  $region2: #{ram_lstm_forward.1} parent=0 // pred_check
    _
  $region3: #{ram_lstm_forward.1} parent=0 // pred_check_branch
    %12 = sbr.rel (0) target = $region5
  $region4: #{ram_lstm_forward.1} parent=0 // pred_region
    _
  $region5: #{ram_lstm_forward.1} parent=0 // pred_fallthru
    _
  // Predicated region
  $region6: #{ram_lstm_forward.1} parent=0 // pred_check
    _
  $region7: #{ram_lstm_forward.1} parent=0 // pred_check_branch
    %14 = sbr.rel (0) target = $region9
  $region8: #{ram_lstm_forward.1} parent=0 // pred_region
    _
  $region9: #{ram_lstm_forward.1} parent=0 // pred_fallthru
    _
  // Predicated region
  $region10: #{ram_lstm_forward.1} parent=0 // pred_check
    _
  $region11: #{ram_lstm_forward.1} parent=0 // pred_check_branch
    %16 = sbr.rel (0) target = $region13
  $region12: #{ram_lstm_forward.1} parent=0 // pred_region
    _
  $region13: #{ram_lstm_forward.1} parent=0 // pred_fallthru
    _
  // Predicated region
  $region14: #{ram_lstm_forward.1} parent=0 // pred_check
    _
  $region15: #{ram_lstm_forward.1} parent=0 // pred_check_branch
    %18 = sbr.rel (0) target = $region17
  $region16: #{ram_lstm_forward.1} parent=0 // pred_region
    _
  $region17: #{ram_lstm_forward.1} parent=0 // pred_fallthru
    _
  // Predicated region
  $region18: #{ram_lstm_forward.1} parent=0 // pred_check
    _
  $region19: #{ram_lstm_forward.1} parent=0 // pred_check_branch
    %20 = sbr.rel (0) target = $region21
  $region20: #{ram_lstm_forward.1} parent=0 // pred_region
    _
  $region21: #{ram_lstm_forward.1} parent=0 // pred_fallthru
    _
  // Predicated region
  $region22: #{ram_lstm_forward.1} parent=0 // pred_check
    _
  $region23: #{ram_lstm_forward.1} parent=0 // pred_check_branch
    %22 = sbr.rel (0) target = $region25
  $region24: #{ram_lstm_forward.1} parent=0 // pred_region
    _
  $region25: #{ram_lstm_forward.1} parent=0 // pred_fallthru
    _
  %v24 = vld [vmem:[%s0] sm:$0xf]
  %v25 = vld [vmem:[%s0 + $0x4] sm:$0xf]
  %v26 = vld [vmem:[%s0 + $0x8] sm:$0xf]
  %v27 = vld [vmem:[%s0 + $0xc] sm:$0xf]
  %v28 = vld [vmem:[%s0 + $0x10] sm:$0xf]
  %v29 = vld [vmem:[%s0 + $0x14] sm:$0xf]
  %v30 = vld [vmem:[%s0 + $0x18] sm:$0xf]
  %v31 = vld [vmem:[%s0 + $0x1c] sm:$0xf]
  %v32 = vld [vmem:[%s1] sm:$0xff]
  %v33 = vld [vmem:[%s1 + $0x8] sm:$0xff]
  %v34 = vld [vmem:[%s1 + $0x10] sm:$0xff]
  %v35 = vld [vmem:[%s1 + $0x18] sm:$0xff]
  %v36 = vld [vmem:[%s1 + $0x20] sm:$0xff]
  %v37 = vld [vmem:[%s1 + $0x28] sm:$0xff]
  %v38 = vld [vmem:[%s1 + $0x30] sm:$0xff]
  %v39 = vld [vmem:[%s1 + $0x38] sm:$0xff]
  %v40 = vld [vmem:[%s1 + $0x40] sm:$0xff]
  %v41 = vld [vmem:[%s1 + $0x48] sm:$0xff]
  %v42 = vld [vmem:[%s1 + $0x50] sm:$0xff]
  %v43 = vld [vmem:[%s1 + $0x58] sm:$0xff]
  %v44 = vld [vmem:[%s1 + $0x60] sm:$0xff]
  %v45 = vld [vmem:[%s1 + $0x68] sm:$0xff]
  %v46 = vld [vmem:[%s1 + $0x70] sm:$0xff]
  %v47 = vld [vmem:[%s1 + $0x78] sm:$0xff]
  %v48 = vld [vmem:[%s3] sm:$0xf]
  %v50 = vlaneseq
  %v51 = vshrl.u32 %v50, 7
  %v52 = vsub.s32 0, %v51
  %v53 = vrot.slane %v48, %v52
  %v54 = vlaneseq
  %v55 = vshrl.u32 %v54, 7
  %v56 = vsub.s32 1, %v55
  %v57 = vrot.slane %v48, %v56
  %v58 = vlaneseq
  %v59 = vshrl.u32 %v58, 7
  %v60 = vsub.s32 2, %v59
  %v61 = vrot.slane %v48, %v60
  %v62 = vlaneseq
  %v63 = vshrl.u32 %v62, 7
  %v64 = vsub.s32 3, %v63
  %v65 = vrot.slane %v48, %v64
  %v78 = vunpack.c.l.b16 %v24
  %v79 = vunpack.c.l.b16 %v25
  %v80 = vunpack.c.l.b16 %v26
  %v81 = vunpack.c.l.b16 %v27
  %v82 = vunpack.c.l.b16 %v28
  %v83 = vunpack.c.l.b16 %v29
  %v84 = vunpack.c.l.b16 %v30
  %v85 = vunpack.c.l.b16 %v31
  %v86 = vpack.c.b16 %v79, %v78
  %v87 = vpack.c.b16 %v81, %v80
  %v88 = vpack.c.b16 %v83, %v82
  %v89 = vpack.c.b16 %v85, %v84
  %v106 = vunpack.c.l.b16 %v32
  %v107 = vunpack.c.h.b16 %v32
  %v108 = vunpack.c.l.b16 %v33
  %v109 = vunpack.c.h.b16 %v33
  %v110 = vunpack.c.l.b16 %v34
  %v111 = vunpack.c.h.b16 %v34
  %v112 = vunpack.c.l.b16 %v35
  %v113 = vunpack.c.h.b16 %v35
  %v114 = vunpack.c.l.b16 %v36
  %v115 = vunpack.c.h.b16 %v36
  %v116 = vunpack.c.l.b16 %v37
  %v117 = vunpack.c.h.b16 %v37
  %v118 = vunpack.c.l.b16 %v38
  %v119 = vunpack.c.h.b16 %v38
  %v120 = vunpack.c.l.b16 %v39
  %v121 = vunpack.c.h.b16 %v39
  %v122 = vunpack.c.l.b16 %v40
  %v123 = vunpack.c.h.b16 %v40
  %v124 = vunpack.c.l.b16 %v41
  %v125 = vunpack.c.h.b16 %v41
  %v126 = vunpack.c.l.b16 %v42
  %v127 = vunpack.c.h.b16 %v42
  %v128 = vunpack.c.l.b16 %v43
  %v129 = vunpack.c.h.b16 %v43
  %v130 = vunpack.c.l.b16 %v44
  %v131 = vunpack.c.h.b16 %v44
  %v132 = vunpack.c.l.b16 %v45
  %v133 = vunpack.c.h.b16 %v45
  %v134 = vunpack.c.l.b16 %v46
  %v135 = vunpack.c.h.b16 %v46
  %v136 = vunpack.c.l.b16 %v47
  %v137 = vunpack.c.h.b16 %v47
  %v138 = vpack.c.b16 %v110, %v106
  %v139 = vpack.c.b16 %v111, %v107
  %v140 = vpack.c.b16 %v112, %v108
  %v141 = vpack.c.b16 %v113, %v109
  %v142 = vpack.c.b16 %v118, %v114
  %v143 = vpack.c.b16 %v119, %v115
  %v144 = vpack.c.b16 %v120, %v116
  %v145 = vpack.c.b16 %v121, %v117
  %v146 = vpack.c.b16 %v126, %v122
  %v147 = vpack.c.b16 %v127, %v123
  %v148 = vpack.c.b16 %v128, %v124
  %v149 = vpack.c.b16 %v129, %v125
  %v150 = vpack.c.b16 %v134, %v130
  %v151 = vpack.c.b16 %v135, %v131
  %v152 = vpack.c.b16 %v136, %v132
  %v153 = vpack.c.b16 %v137, %v133
  %vm170 = vcmask 523264
  %v172 = vsel %vm170, %v86, 0
  %v175 = vsel %vm170, %v87, 0
  %v178 = vsel %vm170, %v88, 0
  %v181 = vsel %vm170, %v89, 0
  %183 = vmatprep.subr.bf16.mxu0 0
  %184 = vmatpush1.bf16.msra.mxu0 0
  %185 = vmatprep.subr.bf16.mxu0 0
  %186 = vmatpush1.bf16.msra.mxu0 0
  %187 = vmatprep.subr.bf16.mxu0 0
  %188 = vmatpush1.bf16.msra.mxu0 0
  %189 = vmatprep.subr.bf16.mxu0 0
  %190 = vmatpush1.bf16.msra.mxu0 0
  %191 = vmatprep.subr.bf16.mxu0 %v151
  %192 = vmatpush1.bf16.msra.mxu0 %v150
  %193 = vmatprep.subr.bf16.mxu0 %v147
  %194 = vmatpush1.bf16.msra.mxu0 %v146
  %195 = vmatprep.subr.bf16.mxu0 %v143
  %196 = vmatpush1.bf16.msra.mxu0 %v142
  %197 = vmatprep.subr.bf16.mxu0 %v139
  %198 = vmatpush1.bf16.msra.mxu0 %v138
  %199 = vmatprep.subr.bf16.mxu0 0
  %200 = vmatpush2.bf16.msra.mxu0 0
  %201 = vmatprep.subr.bf16.mxu0 0
  %202 = vmatpush2.bf16.msra.mxu0 0
  %203 = vmatprep.subr.bf16.mxu0 0
  %204 = vmatpush2.bf16.msra.mxu0 0
  %205 = vmatprep.subr.bf16.mxu0 0
  %206 = vmatpush2.bf16.msra.mxu0 0
  %207 = vmatprep.subr.bf16.mxu0 0
  %208 = vmatpush2.bf16.msra.mxu0 0
  %209 = vmatprep.subr.bf16.mxu0 0
  %210 = vmatpush2.bf16.msra.mxu0 0
  %211 = vmatprep.subr.bf16.mxu0 0
  %212 = vmatpush2.bf16.msra.mxu0 0
  %213 = vmatprep.subr.bf16.mxu0 0
  %214 = vmatpush2.bf16.msra.mxu0 0
  %215 = vmatprep.mubr.bf16.mxu0 0
  %216 = vmatmul.mubr.bf16.gmra.mxu0 %v172
  %v217 = vpop.f32.mrf.mxu0
  %v218 = vadd.f32 %v53, %v217
  %v219 = vpop.f32.mrf.mxu0
  %v220 = vadd.f32 %v57, %v219
  %v221 = vpop.f32.mrf.mxu0
  %v222 = vadd.f32 %v53, %v221
  %v223 = vpop.f32.mrf.mxu0
  %v224 = vadd.f32 %v57, %v223
  %225 = vmatprep.mubr.bf16.mxu0 0
  %226 = vmatmul.mubr.bf16.gmra.mxu0 %v175
  %v227 = vpop.f32.mrf.mxu0
  %v228 = vadd.f32 %v53, %v227
  %v229 = vpop.f32.mrf.mxu0
  %v230 = vadd.f32 %v57, %v229
  %v231 = vpop.f32.mrf.mxu0
  %v232 = vadd.f32 %v53, %v231
  %v233 = vpop.f32.mrf.mxu0
  %v234 = vadd.f32 %v57, %v233
  %235 = vmatprep.mubr.bf16.mxu0 0
  %236 = vmatmul.mubr.bf16.gmra.mxu0 %v178
  %v237 = vpop.f32.mrf.mxu0
  %v238 = vadd.f32 %v53, %v237
  %v239 = vpop.f32.mrf.mxu0
  %v240 = vadd.f32 %v57, %v239
  %v241 = vpop.f32.mrf.mxu0
  %v242 = vadd.f32 %v53, %v241
  %v243 = vpop.f32.mrf.mxu0
  %v244 = vadd.f32 %v57, %v243
  %245 = vmatprep.mubr.bf16.mxu0 0
  %246 = vmatmul.mubr.bf16.gmra.mxu0 %v181
  %v247 = vpop.f32.mrf.mxu0
  %v248 = vadd.f32 %v53, %v247
  %v249 = vpop.f32.mrf.mxu0
  %v250 = vadd.f32 %v57, %v249
  %v251 = vpop.f32.mrf.mxu0
  %v252 = vadd.f32 %v53, %v251
  %v253 = vpop.f32.mrf.mxu0
  %v254 = vadd.f32 %v57, %v253
  %255 = vdwg.mxu0
  %256 = vmatprep.subr.bf16.mxu0 0
  %257 = vmatpush1.bf16.msra.mxu0 0
  %258 = vmatprep.subr.bf16.mxu0 0
  %259 = vmatpush1.bf16.msra.mxu0 0
  %260 = vmatprep.subr.bf16.mxu0 0
  %261 = vmatpush1.bf16.msra.mxu0 0
  %262 = vmatprep.subr.bf16.mxu0 0
  %263 = vmatpush1.bf16.msra.mxu0 0
  %264 = vmatprep.subr.bf16.mxu0 %v153
  %265 = vmatpush1.bf16.msra.mxu0 %v152
  %266 = vmatprep.subr.bf16.mxu0 %v149
  %267 = vmatpush1.bf16.msra.mxu0 %v148
  %268 = vmatprep.subr.bf16.mxu0 %v145
  %269 = vmatpush1.bf16.msra.mxu0 %v144
  %270 = vmatprep.subr.bf16.mxu0 %v141
  %271 = vmatpush1.bf16.msra.mxu0 %v140
  %272 = vmatprep.subr.bf16.mxu0 0
  %273 = vmatpush2.bf16.msra.mxu0 0
  %274 = vmatprep.subr.bf16.mxu0 0
  %275 = vmatpush2.bf16.msra.mxu0 0
  %276 = vmatprep.subr.bf16.mxu0 0
  %277 = vmatpush2.bf16.msra.mxu0 0
  %278 = vmatprep.subr.bf16.mxu0 0
  %279 = vmatpush2.bf16.msra.mxu0 0
  %280 = vmatprep.subr.bf16.mxu0 0
  %281 = vmatpush2.bf16.msra.mxu0 0
  %282 = vmatprep.subr.bf16.mxu0 0
  %283 = vmatpush2.bf16.msra.mxu0 0
  %284 = vmatprep.subr.bf16.mxu0 0
  %285 = vmatpush2.bf16.msra.mxu0 0
  %286 = vmatprep.subr.bf16.mxu0 0
  %287 = vmatpush2.bf16.msra.mxu0 0
  %288 = vmatprep.mubr.bf16.mxu0 0
  %289 = vmatmul.mubr.bf16.gmra.mxu0 %v172
  %v290 = vpop.f32.mrf.mxu0
  %v291 = vadd.f32 %v61, %v290
  %v292 = vpop.f32.mrf.mxu0
  %v293 = vadd.f32 %v65, %v292
  %v294 = vpop.f32.mrf.mxu0
  %v295 = vadd.f32 %v61, %v294
  %v296 = vpop.f32.mrf.mxu0
  %v297 = vadd.f32 %v65, %v296
  %298 = vmatprep.mubr.bf16.mxu0 0
  %299 = vmatmul.mubr.bf16.gmra.mxu0 %v175
  %v300 = vpop.f32.mrf.mxu0
  %v301 = vadd.f32 %v61, %v300
  %v302 = vpop.f32.mrf.mxu0
  %v303 = vadd.f32 %v65, %v302
  %v304 = vpop.f32.mrf.mxu0
  %v305 = vadd.f32 %v61, %v304
  %v306 = vpop.f32.mrf.mxu0
  %v307 = vadd.f32 %v65, %v306
  %308 = vmatprep.mubr.bf16.mxu0 0
  %309 = vmatmul.mubr.bf16.gmra.mxu0 %v178
  %v310 = vpop.f32.mrf.mxu0
  %v311 = vadd.f32 %v61, %v310
  %v312 = vpop.f32.mrf.mxu0
  %v313 = vadd.f32 %v65, %v312
  %v314 = vpop.f32.mrf.mxu0
  %v315 = vadd.f32 %v61, %v314
  %v316 = vpop.f32.mrf.mxu0
  %v317 = vadd.f32 %v65, %v316
  %318 = vmatprep.mubr.bf16.mxu0 0
  %319 = vmatmul.mubr.bf16.gmra.mxu0 %v181
  %v320 = vpop.f32.mrf.mxu0
  %v321 = vadd.f32 %v61, %v320
  %v322 = vpop.f32.mrf.mxu0
  %v323 = vadd.f32 %v65, %v322
  %v324 = vpop.f32.mrf.mxu0
  %v325 = vadd.f32 %v61, %v324
  %v326 = vpop.f32.mrf.mxu0
  %v327 = vadd.f32 %v65, %v326
  %328 = vdwg.mxu0
  %v329 = vld [vmem:[%s2] sm:$0xff]
  %v330 = vld [vmem:[%s2 + $0x8] sm:$0xff]
  %v331 = vld [vmem:[%s2 + $0x10] sm:$0xff]
  %v332 = vld [vmem:[%s2 + $0x18] sm:$0xff]
  %v333 = vld [vmem:[%s2 + $0x20] sm:$0xff]
  %v334 = vld [vmem:[%s2 + $0x28] sm:$0xff]
  %v335 = vld [vmem:[%s2 + $0x30] sm:$0xff]
  %v336 = vld [vmem:[%s2 + $0x38] sm:$0xff]
  %v337 = vld [vmem:[%s2 + $0x40] sm:$0xff]
  %v338 = vld [vmem:[%s2 + $0x48] sm:$0xff]
  %v339 = vld [vmem:[%s2 + $0x50] sm:$0xff]
  %v340 = vld [vmem:[%s2 + $0x58] sm:$0xff]
  %v341 = vld [vmem:[%s2 + $0x60] sm:$0xff]
  %v342 = vld [vmem:[%s2 + $0x68] sm:$0xff]
  %v343 = vld [vmem:[%s2 + $0x70] sm:$0xff]
  %v344 = vld [vmem:[%s2 + $0x78] sm:$0xff]
  %v345 = vld [vmem:[%s2 + $0x80] sm:$0xff]
  %v346 = vld [vmem:[%s2 + $0x88] sm:$0xff]
  %v347 = vld [vmem:[%s2 + $0x90] sm:$0xff]
  %v348 = vld [vmem:[%s2 + $0x98] sm:$0xff]
  %v349 = vld [vmem:[%s2 + $0xa0] sm:$0xff]
  %v350 = vld [vmem:[%s2 + $0xa8] sm:$0xff]
  %v351 = vld [vmem:[%s2 + $0xb0] sm:$0xff]
  %v352 = vld [vmem:[%s2 + $0xb8] sm:$0xff]
  %v353 = vld [vmem:[%s2 + $0xc0] sm:$0xff]
  %v354 = vld [vmem:[%s2 + $0xc8] sm:$0xff]
  %v355 = vld [vmem:[%s2 + $0xd0] sm:$0xff]
  %v356 = vld [vmem:[%s2 + $0xd8] sm:$0xff]
  %v357 = vld [vmem:[%s2 + $0xe0] sm:$0xff]
  %v358 = vld [vmem:[%s2 + $0xe8] sm:$0xff]
  %v359 = vld [vmem:[%s2 + $0xf0] sm:$0xff]
  %v360 = vld [vmem:[%s2 + $0xf8] sm:$0xff]
  %v361 = vld [vmem:[%s2 + $0x100] sm:$0xff]
  %v362 = vld [vmem:[%s2 + $0x108] sm:$0xff]
  %v363 = vld [vmem:[%s2 + $0x110] sm:$0xff]
  %v364 = vld [vmem:[%s2 + $0x118] sm:$0xff]
  %v365 = vld [vmem:[%s2 + $0x120] sm:$0xff]
  %v366 = vld [vmem:[%s2 + $0x128] sm:$0xff]
  %v367 = vld [vmem:[%s2 + $0x130] sm:$0xff]
  %v368 = vld [vmem:[%s2 + $0x138] sm:$0xff]
  %v369 = vld [vmem:[%s2 + $0x140] sm:$0xff]
  %v370 = vld [vmem:[%s2 + $0x148] sm:$0xff]
  %v371 = vld [vmem:[%s2 + $0x150] sm:$0xff]
  %v372 = vld [vmem:[%s2 + $0x158] sm:$0xff]
  %v373 = vld [vmem:[%s2 + $0x160] sm:$0xff]
  %v374 = vld [vmem:[%s2 + $0x168] sm:$0xff]
  %v375 = vld [vmem:[%s2 + $0x170] sm:$0xff]
  %v376 = vld [vmem:[%s2 + $0x178] sm:$0xff]
  %v377 = vld [vmem:[%s2 + $0x180] sm:$0xff]
  %v378 = vld [vmem:[%s2 + $0x188] sm:$0xff]
  %v379 = vld [vmem:[%s2 + $0x190] sm:$0xff]
  %v380 = vld [vmem:[%s2 + $0x198] sm:$0xff]
  %v381 = vld [vmem:[%s2 + $0x1a0] sm:$0xff]
  %v382 = vld [vmem:[%s2 + $0x1a8] sm:$0xff]
  %v383 = vld [vmem:[%s2 + $0x1b0] sm:$0xff]
  %v384 = vld [vmem:[%s2 + $0x1b8] sm:$0xff]
  %v385 = vld [vmem:[%s2 + $0x1c0] sm:$0xff]
  %v386 = vld [vmem:[%s2 + $0x1c8] sm:$0xff]
  %v387 = vld [vmem:[%s2 + $0x1d0] sm:$0xff]
  %v388 = vld [vmem:[%s2 + $0x1d8] sm:$0xff]
  %v389 = vld [vmem:[%s2 + $0x1e0] sm:$0xff]
  %v390 = vld [vmem:[%s2 + $0x1e8] sm:$0xff]
  %v391 = vld [vmem:[%s2 + $0x1f0] sm:$0xff]
  %v392 = vld [vmem:[%s2 + $0x1f8] sm:$0xff]
  %393 = vmatprep.subr.mxu0 %v390
  %394 = vmatpush1.msra.mxu0 %v389
  %395 = vmatprep.subr.mxu0 %v386
  %396 = vmatpush1.msra.mxu0 %v385
  %397 = vmatprep.subr.mxu0 %v382
  %398 = vmatpush1.msra.mxu0 %v381
  %399 = vmatprep.subr.mxu0 %v378
  %400 = vmatpush1.msra.mxu0 %v377
  %401 = vmatprep.subr.mxu0 %v374
  %402 = vmatpush1.msra.mxu0 %v373
  %403 = vmatprep.subr.mxu0 %v370
  %404 = vmatpush1.msra.mxu0 %v369
  %405 = vmatprep.subr.mxu0 %v366
  %406 = vmatpush1.msra.mxu0 %v365
  %407 = vmatprep.subr.mxu0 %v362
  %408 = vmatpush1.msra.mxu0 %v361
  %409 = vmatprep.subr.mxu0 %v358
  %410 = vmatpush1.msra.mxu0 %v357
  %411 = vmatprep.subr.mxu0 %v354
  %412 = vmatpush1.msra.mxu0 %v353
  %413 = vmatprep.subr.mxu0 %v350
  %414 = vmatpush1.msra.mxu0 %v349
  %415 = vmatprep.subr.mxu0 %v346
  %416 = vmatpush1.msra.mxu0 %v345
  %417 = vmatprep.subr.mxu0 %v342
  %418 = vmatpush1.msra.mxu0 %v341
  %419 = vmatprep.subr.mxu0 %v338
  %420 = vmatpush1.msra.mxu0 %v337
  %421 = vmatprep.subr.mxu0 %v334
  %422 = vmatpush1.msra.mxu0 %v333
  %423 = vmatprep.subr.mxu0 %v330
  %424 = vmatpush1.msra.mxu0 %v329
  %425 = vmatprep.subr.mxu0 0.0
  %426 = vmatpush2.msra.mxu0 0.0
  %427 = vmatprep.subr.mxu0 0.0
  %428 = vmatpush2.msra.mxu0 0.0
  %429 = vmatprep.subr.mxu0 0.0
  %430 = vmatpush2.msra.mxu0 0.0
  %431 = vmatprep.subr.mxu0 0.0
  %432 = vmatpush2.msra.mxu0 0.0
  %433 = vmatprep.subr.mxu0 0.0
  %434 = vmatpush2.msra.mxu0 0.0
  %435 = vmatprep.subr.mxu0 0.0
  %436 = vmatpush2.msra.mxu0 0.0
  %437 = vmatprep.subr.mxu0 0.0
  %438 = vmatpush2.msra.mxu0 0.0
  %439 = vmatprep.subr.mxu0 0.0
  %440 = vmatpush2.msra.mxu0 0.0
  %441 = vmatprep.subr.mxu0 0.0
  %442 = vmatpush2.msra.mxu0 0.0
  %443 = vmatprep.subr.mxu0 0.0
  %444 = vmatpush2.msra.mxu0 0.0
  %445 = vmatprep.subr.mxu0 0.0
  %446 = vmatpush2.msra.mxu0 0.0
  %447 = vmatprep.subr.mxu0 0.0
  %448 = vmatpush2.msra.mxu0 0.0
  %449 = vmatprep.subr.mxu0 0.0
  %450 = vmatpush2.msra.mxu0 0.0
  %451 = vmatprep.subr.mxu0 0.0
  %452 = vmatpush2.msra.mxu0 0.0
  %453 = vmatprep.subr.mxu0 0.0
  %454 = vmatpush2.msra.mxu0 0.0
  %455 = vmatprep.subr.mxu0 0.0
  %456 = vmatpush2.msra.mxu0 0.0
  %457 = vmatprep.mubr.f32.mxu0 0.0
  %458 = vmatmul.mubr.f32.gmra.mxu0 0.0
  %v459 = vpop.f32.mrf.mxu0
  %v460 = vadd.f32 0.0, %v459
  %v461 = vpop.f32.mrf.mxu0
  %v462 = vadd.f32 0.0, %v461
  %463 = vdwg.mxu0
  %464 = vmatprep.subr.mxu0 %v392
  %465 = vmatpush1.msra.mxu0 %v391
  %466 = vmatprep.subr.mxu0 %v388
  %467 = vmatpush1.msra.mxu0 %v387
  %468 = vmatprep.subr.mxu0 %v384
  %469 = vmatpush1.msra.mxu0 %v383
  %470 = vmatprep.subr.mxu0 %v380
  %471 = vmatpush1.msra.mxu0 %v379
  %472 = vmatprep.subr.mxu0 %v376
  %473 = vmatpush1.msra.mxu0 %v375
  %474 = vmatprep.subr.mxu0 %v372
  %475 = vmatpush1.msra.mxu0 %v371
  %476 = vmatprep.subr.mxu0 %v368
  %477 = vmatpush1.msra.mxu0 %v367
  %478 = vmatprep.subr.mxu0 %v364
  %479 = vmatpush1.msra.mxu0 %v363
  %480 = vmatprep.subr.mxu0 %v360
  %481 = vmatpush1.msra.mxu0 %v359
  %482 = vmatprep.subr.mxu0 %v356
  %483 = vmatpush1.msra.mxu0 %v355
  %484 = vmatprep.subr.mxu0 %v352
  %485 = vmatpush1.msra.mxu0 %v351
  %486 = vmatprep.subr.mxu0 %v348
  %487 = vmatpush1.msra.mxu0 %v347
  %488 = vmatprep.subr.mxu0 %v344
  %489 = vmatpush1.msra.mxu0 %v343
  %490 = vmatprep.subr.mxu0 %v340
  %491 = vmatpush1.msra.mxu0 %v339
  %492 = vmatprep.subr.mxu0 %v336
  %493 = vmatpush1.msra.mxu0 %v335
  %494 = vmatprep.subr.mxu0 %v332
  %495 = vmatpush1.msra.mxu0 %v331
  %496 = vmatprep.subr.mxu0 0.0
  %497 = vmatpush2.msra.mxu0 0.0
  %498 = vmatprep.subr.mxu0 0.0
  %499 = vmatpush2.msra.mxu0 0.0
  %500 = vmatprep.subr.mxu0 0.0
  %501 = vmatpush2.msra.mxu0 0.0
  %502 = vmatprep.subr.mxu0 0.0
  %503 = vmatpush2.msra.mxu0 0.0
  %504 = vmatprep.subr.mxu0 0.0
  %505 = vmatpush2.msra.mxu0 0.0
  %506 = vmatprep.subr.mxu0 0.0
  %507 = vmatpush2.msra.mxu0 0.0
  %508 = vmatprep.subr.mxu0 0.0
  %509 = vmatpush2.msra.mxu0 0.0
  %510 = vmatprep.subr.mxu0 0.0
  %511 = vmatpush2.msra.mxu0 0.0
  %512 = vmatprep.subr.mxu0 0.0
  %513 = vmatpush2.msra.mxu0 0.0
  %514 = vmatprep.subr.mxu0 0.0
  %515 = vmatpush2.msra.mxu0 0.0
  %516 = vmatprep.subr.mxu0 0.0
  %517 = vmatpush2.msra.mxu0 0.0
  %518 = vmatprep.subr.mxu0 0.0
  %519 = vmatpush2.msra.mxu0 0.0
  %520 = vmatprep.subr.mxu0 0.0
  %521 = vmatpush2.msra.mxu0 0.0
  %522 = vmatprep.subr.mxu0 0.0
  %523 = vmatpush2.msra.mxu0 0.0
  %524 = vmatprep.subr.mxu0 0.0
  %525 = vmatpush2.msra.mxu0 0.0
  %526 = vmatprep.subr.mxu0 0.0
  %527 = vmatpush2.msra.mxu0 0.0
  %528 = vmatprep.mubr.f32.mxu0 0.0
  %529 = vmatmul.mubr.f32.gmra.mxu0 0.0
  %v530 = vpop.f32.mrf.mxu0
  %v531 = vadd.f32 0.0, %v530
  %v532 = vpop.f32.mrf.mxu0
  %v533 = vadd.f32 0.0, %v532
  %534 = vdwg.mxu0
  %v535 = vadd.f32 %v218, %v460
  %v536 = vadd.f32 %v220, %v462
  %v537 = vadd.f32 %v291, %v531
  %v538 = vadd.f32 %v293, %v533
  %v539 = vtanh.pop %v535
  %v540 = vtanh.pop %v536
  %v541 = vtanh.pop %v537
  %v542 = vtanh.pop %v538
  %v543 = vmul.f32 %v539, 0.5
  %v544 = vadd.f32 %v543, 0.5
  %v545 = vmul.f32 %v540, 0.5
  %v546 = vadd.f32 %v545, 0.5
  %v547 = vmul.f32 %v542, 0.5
  %v548 = vadd.f32 %v547, 0.5
  %v549 = vmul.f32 %v546, 0.0
  %v550 = vmul.f32 %v544, %v541
  %v551 = vadd.f32 %v549, %v550
  %v552 = vtanh.pop %v551
  %v553 = vmul.f32 %v548, %v552
  %554 = vmatprep.subr.mxu0 %v390
  %555 = vmatpush1.msra.mxu0 %v389
  %556 = vmatprep.subr.mxu0 %v386
  %557 = vmatpush1.msra.mxu0 %v385
  %558 = vmatprep.subr.mxu0 %v382
  %559 = vmatpush1.msra.mxu0 %v381
  %560 = vmatprep.subr.mxu0 %v378
  %561 = vmatpush1.msra.mxu0 %v377
  %562 = vmatprep.subr.mxu0 %v374
  %563 = vmatpush1.msra.mxu0 %v373
  %564 = vmatprep.subr.mxu0 %v370
  %565 = vmatpush1.msra.mxu0 %v369
  %566 = vmatprep.subr.mxu0 %v366
  %567 = vmatpush1.msra.mxu0 %v365
  %568 = vmatprep.subr.mxu0 %v362
  %569 = vmatpush1.msra.mxu0 %v361
  %570 = vmatprep.subr.mxu0 %v358
  %571 = vmatpush1.msra.mxu0 %v357
  %572 = vmatprep.subr.mxu0 %v354
  %573 = vmatpush1.msra.mxu0 %v353
  %574 = vmatprep.subr.mxu0 %v350
  %575 = vmatpush1.msra.mxu0 %v349
  %576 = vmatprep.subr.mxu0 %v346
  %577 = vmatpush1.msra.mxu0 %v345
  %578 = vmatprep.subr.mxu0 %v342
  %579 = vmatpush1.msra.mxu0 %v341
  %580 = vmatprep.subr.mxu0 %v338
  %581 = vmatpush1.msra.mxu0 %v337
  %582 = vmatprep.subr.mxu0 %v334
  %583 = vmatpush1.msra.mxu0 %v333
  %584 = vmatprep.subr.mxu0 %v330
  %585 = vmatpush1.msra.mxu0 %v329
  %586 = vmatprep.subr.mxu0 0.0
  %587 = vmatpush2.msra.mxu0 0.0
  %588 = vmatprep.subr.mxu0 0.0
  %589 = vmatpush2.msra.mxu0 0.0
  %590 = vmatprep.subr.mxu0 0.0
  %591 = vmatpush2.msra.mxu0 0.0
  %592 = vmatprep.subr.mxu0 0.0
  %593 = vmatpush2.msra.mxu0 0.0
  %594 = vmatprep.subr.mxu0 0.0
  %595 = vmatpush2.msra.mxu0 0.0
  %596 = vmatprep.subr.mxu0 0.0
  %597 = vmatpush2.msra.mxu0 0.0
  %598 = vmatprep.subr.mxu0 0.0
  %599 = vmatpush2.msra.mxu0 0.0
  %600 = vmatprep.subr.mxu0 0.0
  %601 = vmatpush2.msra.mxu0 0.0
  %602 = vmatprep.subr.mxu0 0.0
  %603 = vmatpush2.msra.mxu0 0.0
  %604 = vmatprep.subr.mxu0 0.0
  %605 = vmatpush2.msra.mxu0 0.0
  %606 = vmatprep.subr.mxu0 0.0
  %607 = vmatpush2.msra.mxu0 0.0
  %608 = vmatprep.subr.mxu0 0.0
  %609 = vmatpush2.msra.mxu0 0.0
  %610 = vmatprep.subr.mxu0 0.0
  %611 = vmatpush2.msra.mxu0 0.0
  %612 = vmatprep.subr.mxu0 0.0
  %613 = vmatpush2.msra.mxu0 0.0
  %614 = vmatprep.subr.mxu0 0.0
  %615 = vmatpush2.msra.mxu0 0.0
  %616 = vmatprep.subr.mxu0 0.0
  %617 = vmatpush2.msra.mxu0 0.0
  %618 = vmatprep.mubr.f32.mxu0 0.0
  %619 = vmatmul.mubr.f32.gmra.mxu0 %v553
  %v620 = vpop.f32.mrf.mxu0
  %v621 = vadd.f32 0.0, %v620
  %v622 = vpop.f32.mrf.mxu0
  %v623 = vadd.f32 0.0, %v622
  %624 = vdwg.mxu0
  %625 = vmatprep.subr.mxu0 %v392
  %626 = vmatpush1.msra.mxu0 %v391
  %627 = vmatprep.subr.mxu0 %v388
  %628 = vmatpush1.msra.mxu0 %v387
  %629 = vmatprep.subr.mxu0 %v384
  %630 = vmatpush1.msra.mxu0 %v383
  %631 = vmatprep.subr.mxu0 %v380
  %632 = vmatpush1.msra.mxu0 %v379
  %633 = vmatprep.subr.mxu0 %v376
  %634 = vmatpush1.msra.mxu0 %v375
  %635 = vmatprep.subr.mxu0 %v372
  %636 = vmatpush1.msra.mxu0 %v371
  %637 = vmatprep.subr.mxu0 %v368
  %638 = vmatpush1.msra.mxu0 %v367
  %639 = vmatprep.subr.mxu0 %v364
  %640 = vmatpush1.msra.mxu0 %v363
  %641 = vmatprep.subr.mxu0 %v360
  %642 = vmatpush1.msra.mxu0 %v359
  %643 = vmatprep.subr.mxu0 %v356
  %644 = vmatpush1.msra.mxu0 %v355
  %645 = vmatprep.subr.mxu0 %v352
  %646 = vmatpush1.msra.mxu0 %v351
  %647 = vmatprep.subr.mxu0 %v348
  %648 = vmatpush1.msra.mxu0 %v347
  %649 = vmatprep.subr.mxu0 %v344
  %650 = vmatpush1.msra.mxu0 %v343
  %651 = vmatprep.subr.mxu0 %v340
  %652 = vmatpush1.msra.mxu0 %v339
  %653 = vmatprep.subr.mxu0 %v336
  %654 = vmatpush1.msra.mxu0 %v335
  %655 = vmatprep.subr.mxu0 %v332
  %656 = vmatpush1.msra.mxu0 %v331
  %657 = vmatprep.subr.mxu0 0.0
  %658 = vmatpush2.msra.mxu0 0.0
  %659 = vmatprep.subr.mxu0 0.0
  %660 = vmatpush2.msra.mxu0 0.0
  %661 = vmatprep.subr.mxu0 0.0
  %662 = vmatpush2.msra.mxu0 0.0
  %663 = vmatprep.subr.mxu0 0.0
  %664 = vmatpush2.msra.mxu0 0.0
  %665 = vmatprep.subr.mxu0 0.0
  %666 = vmatpush2.msra.mxu0 0.0
  %667 = vmatprep.subr.mxu0 0.0
  %668 = vmatpush2.msra.mxu0 0.0
  %669 = vmatprep.subr.mxu0 0.0
  %670 = vmatpush2.msra.mxu0 0.0
  %671 = vmatprep.subr.mxu0 0.0
  %672 = vmatpush2.msra.mxu0 0.0
  %673 = vmatprep.subr.mxu0 0.0
  %674 = vmatpush2.msra.mxu0 0.0
  %675 = vmatprep.subr.mxu0 0.0
  %676 = vmatpush2.msra.mxu0 0.0
  %677 = vmatprep.subr.mxu0 0.0
  %678 = vmatpush2.msra.mxu0 0.0
  %679 = vmatprep.subr.mxu0 0.0
  %680 = vmatpush2.msra.mxu0 0.0
  %681 = vmatprep.subr.mxu0 0.0
  %682 = vmatpush2.msra.mxu0 0.0
  %683 = vmatprep.subr.mxu0 0.0
  %684 = vmatpush2.msra.mxu0 0.0
  %685 = vmatprep.subr.mxu0 0.0
  %686 = vmatpush2.msra.mxu0 0.0
  %687 = vmatprep.subr.mxu0 0.0
  %688 = vmatpush2.msra.mxu0 0.0
  %689 = vmatprep.mubr.f32.mxu0 0.0
  %690 = vmatmul.mubr.f32.gmra.mxu0 %v553
  %v691 = vpop.f32.mrf.mxu0
  %v692 = vadd.f32 0.0, %v691
  %v693 = vpop.f32.mrf.mxu0
  %v694 = vadd.f32 0.0, %v693
  %695 = vdwg.mxu0
  %v696 = vadd.f32 %v222, %v621
  %v697 = vadd.f32 %v224, %v623
  %v698 = vadd.f32 %v295, %v692
  %v699 = vadd.f32 %v297, %v694
  %v700 = vtanh.pop %v696
  %v701 = vtanh.pop %v697
  %v702 = vtanh.pop %v698
  %v703 = vtanh.pop %v699
  %v704 = vmul.f32 %v700, 0.5
  %v705 = vadd.f32 %v704, 0.5
  %v706 = vmul.f32 %v701, 0.5
  %v707 = vadd.f32 %v706, 0.5
  %v708 = vmul.f32 %v703, 0.5
  %v709 = vadd.f32 %v708, 0.5
  %v710 = vmul.f32 %v707, %v551
  %v711 = vmul.f32 %v705, %v702
  %v712 = vadd.f32 %v710, %v711
  %v713 = vtanh.pop %v712
  %v714 = vmul.f32 %v709, %v713
  %715 = vmatprep.subr.mxu0 %v390
  %716 = vmatpush1.msra.mxu0 %v389
  %717 = vmatprep.subr.mxu0 %v386
  %718 = vmatpush1.msra.mxu0 %v385
  %719 = vmatprep.subr.mxu0 %v382
  %720 = vmatpush1.msra.mxu0 %v381
  %721 = vmatprep.subr.mxu0 %v378
  %722 = vmatpush1.msra.mxu0 %v377
  %723 = vmatprep.subr.mxu0 %v374
  %724 = vmatpush1.msra.mxu0 %v373
  %725 = vmatprep.subr.mxu0 %v370
  %726 = vmatpush1.msra.mxu0 %v369
  %727 = vmatprep.subr.mxu0 %v366
  %728 = vmatpush1.msra.mxu0 %v365
  %729 = vmatprep.subr.mxu0 %v362
  %730 = vmatpush1.msra.mxu0 %v361
  %731 = vmatprep.subr.mxu0 %v358
  %732 = vmatpush1.msra.mxu0 %v357
  %733 = vmatprep.subr.mxu0 %v354
  %734 = vmatpush1.msra.mxu0 %v353
  %735 = vmatprep.subr.mxu0 %v350
  %736 = vmatpush1.msra.mxu0 %v349
  %737 = vmatprep.subr.mxu0 %v346
  %738 = vmatpush1.msra.mxu0 %v345
  %739 = vmatprep.subr.mxu0 %v342
  %740 = vmatpush1.msra.mxu0 %v341
  %741 = vmatprep.subr.mxu0 %v338
  %742 = vmatpush1.msra.mxu0 %v337
  %743 = vmatprep.subr.mxu0 %v334
  %744 = vmatpush1.msra.mxu0 %v333
  %745 = vmatprep.subr.mxu0 %v330
  %746 = vmatpush1.msra.mxu0 %v329
  %747 = vmatprep.subr.mxu0 0.0
  %748 = vmatpush2.msra.mxu0 0.0
  %749 = vmatprep.subr.mxu0 0.0
  %750 = vmatpush2.msra.mxu0 0.0
  %751 = vmatprep.subr.mxu0 0.0
  %752 = vmatpush2.msra.mxu0 0.0
  %753 = vmatprep.subr.mxu0 0.0
  %754 = vmatpush2.msra.mxu0 0.0
  %755 = vmatprep.subr.mxu0 0.0
  %756 = vmatpush2.msra.mxu0 0.0
  %757 = vmatprep.subr.mxu0 0.0
  %758 = vmatpush2.msra.mxu0 0.0
  %759 = vmatprep.subr.mxu0 0.0
  %760 = vmatpush2.msra.mxu0 0.0
  %761 = vmatprep.subr.mxu0 0.0
  %762 = vmatpush2.msra.mxu0 0.0
  %763 = vmatprep.subr.mxu0 0.0
  %764 = vmatpush2.msra.mxu0 0.0
  %765 = vmatprep.subr.mxu0 0.0
  %766 = vmatpush2.msra.mxu0 0.0
  %767 = vmatprep.subr.mxu0 0.0
  %768 = vmatpush2.msra.mxu0 0.0
  %769 = vmatprep.subr.mxu0 0.0
  %770 = vmatpush2.msra.mxu0 0.0
  %771 = vmatprep.subr.mxu0 0.0
  %772 = vmatpush2.msra.mxu0 0.0
  %773 = vmatprep.subr.mxu0 0.0
  %774 = vmatpush2.msra.mxu0 0.0
  %775 = vmatprep.subr.mxu0 0.0
  %776 = vmatpush2.msra.mxu0 0.0
  %777 = vmatprep.subr.mxu0 0.0
  %778 = vmatpush2.msra.mxu0 0.0
  %779 = vmatprep.mubr.f32.mxu0 0.0
  %780 = vmatmul.mubr.f32.gmra.mxu0 %v714
  %v781 = vpop.f32.mrf.mxu0
  %v782 = vadd.f32 0.0, %v781
  %v783 = vpop.f32.mrf.mxu0
  %v784 = vadd.f32 0.0, %v783
  %785 = vdwg.mxu0
  %786 = vmatprep.subr.mxu0 %v392
  %787 = vmatpush1.msra.mxu0 %v391
  %788 = vmatprep.subr.mxu0 %v388
  %789 = vmatpush1.msra.mxu0 %v387
  %790 = vmatprep.subr.mxu0 %v384
  %791 = vmatpush1.msra.mxu0 %v383
  %792 = vmatprep.subr.mxu0 %v380
  %793 = vmatpush1.msra.mxu0 %v379
  %794 = vmatprep.subr.mxu0 %v376
  %795 = vmatpush1.msra.mxu0 %v375
  %796 = vmatprep.subr.mxu0 %v372
  %797 = vmatpush1.msra.mxu0 %v371
  %798 = vmatprep.subr.mxu0 %v368
  %799 = vmatpush1.msra.mxu0 %v367
  %800 = vmatprep.subr.mxu0 %v364
  %801 = vmatpush1.msra.mxu0 %v363
  %802 = vmatprep.subr.mxu0 %v360
  %803 = vmatpush1.msra.mxu0 %v359
  %804 = vmatprep.subr.mxu0 %v356
  %805 = vmatpush1.msra.mxu0 %v355
  %806 = vmatprep.subr.mxu0 %v352
  %807 = vmatpush1.msra.mxu0 %v351
  %808 = vmatprep.subr.mxu0 %v348
  %809 = vmatpush1.msra.mxu0 %v347
  %810 = vmatprep.subr.mxu0 %v344
  %811 = vmatpush1.msra.mxu0 %v343
  %812 = vmatprep.subr.mxu0 %v340
  %813 = vmatpush1.msra.mxu0 %v339
  %814 = vmatprep.subr.mxu0 %v336
  %815 = vmatpush1.msra.mxu0 %v335
  %816 = vmatprep.subr.mxu0 %v332
  %817 = vmatpush1.msra.mxu0 %v331
  %818 = vmatprep.subr.mxu0 0.0
  %819 = vmatpush2.msra.mxu0 0.0
  %820 = vmatprep.subr.mxu0 0.0
  %821 = vmatpush2.msra.mxu0 0.0
  %822 = vmatprep.subr.mxu0 0.0
  %823 = vmatpush2.msra.mxu0 0.0
  %824 = vmatprep.subr.mxu0 0.0
  %825 = vmatpush2.msra.mxu0 0.0
  %826 = vmatprep.subr.mxu0 0.0
  %827 = vmatpush2.msra.mxu0 0.0
  %828 = vmatprep.subr.mxu0 0.0
  %829 = vmatpush2.msra.mxu0 0.0
  %830 = vmatprep.subr.mxu0 0.0
  %831 = vmatpush2.msra.mxu0 0.0
  %832 = vmatprep.subr.mxu0 0.0
  %833 = vmatpush2.msra.mxu0 0.0
  %834 = vmatprep.subr.mxu0 0.0
  %835 = vmatpush2.msra.mxu0 0.0
  %836 = vmatprep.subr.mxu0 0.0
  %837 = vmatpush2.msra.mxu0 0.0
  %838 = vmatprep.subr.mxu0 0.0
  %839 = vmatpush2.msra.mxu0 0.0
  %840 = vmatprep.subr.mxu0 0.0
  %841 = vmatpush2.msra.mxu0 0.0
  %842 = vmatprep.subr.mxu0 0.0
  %843 = vmatpush2.msra.mxu0 0.0
  %844 = vmatprep.subr.mxu0 0.0
  %845 = vmatpush2.msra.mxu0 0.0
  %846 = vmatprep.subr.mxu0 0.0
  %847 = vmatpush2.msra.mxu0 0.0
  %848 = vmatprep.subr.mxu0 0.0
  %849 = vmatpush2.msra.mxu0 0.0
  %850 = vmatprep.mubr.f32.mxu0 0.0
  %851 = vmatmul.mubr.f32.gmra.mxu0 %v714
  %v852 = vpop.f32.mrf.mxu0
  %v853 = vadd.f32 0.0, %v852
  %v854 = vpop.f32.mrf.mxu0
  %v855 = vadd.f32 0.0, %v854
  %856 = vdwg.mxu0
  %v857 = vadd.f32 %v228, %v782
  %v858 = vadd.f32 %v230, %v784
  %v859 = vadd.f32 %v301, %v853
  %v860 = vadd.f32 %v303, %v855
  %v861 = vtanh.pop %v857
  %v862 = vtanh.pop %v858
  %v863 = vtanh.pop %v859
  %v864 = vtanh.pop %v860
  %v865 = vmul.f32 %v861, 0.5
  %v866 = vadd.f32 %v865, 0.5
  %v867 = vmul.f32 %v862, 0.5
  %v868 = vadd.f32 %v867, 0.5
  %v869 = vmul.f32 %v864, 0.5
  %v870 = vadd.f32 %v869, 0.5
  %v871 = vmul.f32 %v868, %v712
  %v872 = vmul.f32 %v866, %v863
  %v873 = vadd.f32 %v871, %v872
  %v874 = vtanh.pop %v873
  %v875 = vmul.f32 %v870, %v874
  %876 = vmatprep.subr.mxu0 %v390
  %877 = vmatpush1.msra.mxu0 %v389
  %878 = vmatprep.subr.mxu0 %v386
  %879 = vmatpush1.msra.mxu0 %v385
  %880 = vmatprep.subr.mxu0 %v382
  %881 = vmatpush1.msra.mxu0 %v381
  %882 = vmatprep.subr.mxu0 %v378
  %883 = vmatpush1.msra.mxu0 %v377
  %884 = vmatprep.subr.mxu0 %v374
  %885 = vmatpush1.msra.mxu0 %v373
  %886 = vmatprep.subr.mxu0 %v370
  %887 = vmatpush1.msra.mxu0 %v369
  %888 = vmatprep.subr.mxu0 %v366
  %889 = vmatpush1.msra.mxu0 %v365
  %890 = vmatprep.subr.mxu0 %v362
  %891 = vmatpush1.msra.mxu0 %v361
  %892 = vmatprep.subr.mxu0 %v358
  %893 = vmatpush1.msra.mxu0 %v357
  %894 = vmatprep.subr.mxu0 %v354
  %895 = vmatpush1.msra.mxu0 %v353
  %896 = vmatprep.subr.mxu0 %v350
  %897 = vmatpush1.msra.mxu0 %v349
  %898 = vmatprep.subr.mxu0 %v346
  %899 = vmatpush1.msra.mxu0 %v345
  %900 = vmatprep.subr.mxu0 %v342
  %901 = vmatpush1.msra.mxu0 %v341
  %902 = vmatprep.subr.mxu0 %v338
  %903 = vmatpush1.msra.mxu0 %v337
  %904 = vmatprep.subr.mxu0 %v334
  %905 = vmatpush1.msra.mxu0 %v333
  %906 = vmatprep.subr.mxu0 %v330
  %907 = vmatpush1.msra.mxu0 %v329
  %908 = vmatprep.subr.mxu0 0.0
  %909 = vmatpush2.msra.mxu0 0.0
  %910 = vmatprep.subr.mxu0 0.0
  %911 = vmatpush2.msra.mxu0 0.0
  %912 = vmatprep.subr.mxu0 0.0
  %913 = vmatpush2.msra.mxu0 0.0
  %914 = vmatprep.subr.mxu0 0.0
  %915 = vmatpush2.msra.mxu0 0.0
  %916 = vmatprep.subr.mxu0 0.0
  %917 = vmatpush2.msra.mxu0 0.0
  %918 = vmatprep.subr.mxu0 0.0
  %919 = vmatpush2.msra.mxu0 0.0
  %920 = vmatprep.subr.mxu0 0.0
  %921 = vmatpush2.msra.mxu0 0.0
  %922 = vmatprep.subr.mxu0 0.0
  %923 = vmatpush2.msra.mxu0 0.0
  %924 = vmatprep.subr.mxu0 0.0
  %925 = vmatpush2.msra.mxu0 0.0
  %926 = vmatprep.subr.mxu0 0.0
  %927 = vmatpush2.msra.mxu0 0.0
  %928 = vmatprep.subr.mxu0 0.0
  %929 = vmatpush2.msra.mxu0 0.0
  %930 = vmatprep.subr.mxu0 0.0
  %931 = vmatpush2.msra.mxu0 0.0
  %932 = vmatprep.subr.mxu0 0.0
  %933 = vmatpush2.msra.mxu0 0.0
  %934 = vmatprep.subr.mxu0 0.0
  %935 = vmatpush2.msra.mxu0 0.0
  %936 = vmatprep.subr.mxu0 0.0
  %937 = vmatpush2.msra.mxu0 0.0
  %938 = vmatprep.subr.mxu0 0.0
  %939 = vmatpush2.msra.mxu0 0.0
  %940 = vmatprep.mubr.f32.mxu0 0.0
  %941 = vmatmul.mubr.f32.gmra.mxu0 %v875
  %v942 = vpop.f32.mrf.mxu0
  %v943 = vadd.f32 0.0, %v942
  %v944 = vpop.f32.mrf.mxu0
  %v945 = vadd.f32 0.0, %v944
  %946 = vdwg.mxu0
  %947 = vmatprep.subr.mxu0 %v392
  %948 = vmatpush1.msra.mxu0 %v391
  %949 = vmatprep.subr.mxu0 %v388
  %950 = vmatpush1.msra.mxu0 %v387
  %951 = vmatprep.subr.mxu0 %v384
  %952 = vmatpush1.msra.mxu0 %v383
  %953 = vmatprep.subr.mxu0 %v380
  %954 = vmatpush1.msra.mxu0 %v379
  %955 = vmatprep.subr.mxu0 %v376
  %956 = vmatpush1.msra.mxu0 %v375
  %957 = vmatprep.subr.mxu0 %v372
  %958 = vmatpush1.msra.mxu0 %v371
  %959 = vmatprep.subr.mxu0 %v368
  %960 = vmatpush1.msra.mxu0 %v367
  %961 = vmatprep.subr.mxu0 %v364
  %962 = vmatpush1.msra.mxu0 %v363
  %963 = vmatprep.subr.mxu0 %v360
  %964 = vmatpush1.msra.mxu0 %v359
  %965 = vmatprep.subr.mxu0 %v356
  %966 = vmatpush1.msra.mxu0 %v355
  %967 = vmatprep.subr.mxu0 %v352
  %968 = vmatpush1.msra.mxu0 %v351
  %969 = vmatprep.subr.mxu0 %v348
  %970 = vmatpush1.msra.mxu0 %v347
  %971 = vmatprep.subr.mxu0 %v344
  %972 = vmatpush1.msra.mxu0 %v343
  %973 = vmatprep.subr.mxu0 %v340
  %974 = vmatpush1.msra.mxu0 %v339
  %975 = vmatprep.subr.mxu0 %v336
  %976 = vmatpush1.msra.mxu0 %v335
  %977 = vmatprep.subr.mxu0 %v332
  %978 = vmatpush1.msra.mxu0 %v331
  %979 = vmatprep.subr.mxu0 0.0
  %980 = vmatpush2.msra.mxu0 0.0
  %981 = vmatprep.subr.mxu0 0.0
  %982 = vmatpush2.msra.mxu0 0.0
  %983 = vmatprep.subr.mxu0 0.0
  %984 = vmatpush2.msra.mxu0 0.0
  %985 = vmatprep.subr.mxu0 0.0
  %986 = vmatpush2.msra.mxu0 0.0
  %987 = vmatprep.subr.mxu0 0.0
  %988 = vmatpush2.msra.mxu0 0.0
  %989 = vmatprep.subr.mxu0 0.0
  %990 = vmatpush2.msra.mxu0 0.0
  %991 = vmatprep.subr.mxu0 0.0
  %992 = vmatpush2.msra.mxu0 0.0
  %993 = vmatprep.subr.mxu0 0.0
  %994 = vmatpush2.msra.mxu0 0.0
  %995 = vmatprep.subr.mxu0 0.0
  %996 = vmatpush2.msra.mxu0 0.0
  %997 = vmatprep.subr.mxu0 0.0
  %998 = vmatpush2.msra.mxu0 0.0
  %999 = vmatprep.subr.mxu0 0.0
  %1000 = vmatpush2.msra.mxu0 0.0
  %1001 = vmatprep.subr.mxu0 0.0
  %1002 = vmatpush2.msra.mxu0 0.0
  %1003 = vmatprep.subr.mxu0 0.0
  %1004 = vmatpush2.msra.mxu0 0.0
  %1005 = vmatprep.subr.mxu0 0.0
  %1006 = vmatpush2.msra.mxu0 0.0
  %1007 = vmatprep.subr.mxu0 0.0
  %1008 = vmatpush2.msra.mxu0 0.0
  %1009 = vmatprep.subr.mxu0 0.0
  %1010 = vmatpush2.msra.mxu0 0.0
  %1011 = vmatprep.mubr.f32.mxu0 0.0
  %1012 = vmatmul.mubr.f32.gmra.mxu0 %v875
  %v1013 = vpop.f32.mrf.mxu0
  %v1014 = vadd.f32 0.0, %v1013
  %v1015 = vpop.f32.mrf.mxu0
  %v1016 = vadd.f32 0.0, %v1015
  %1017 = vdwg.mxu0
  %v1018 = vadd.f32 %v232, %v943
  %v1019 = vadd.f32 %v234, %v945
  %v1020 = vadd.f32 %v305, %v1014
  %v1021 = vadd.f32 %v307, %v1016
  %v1022 = vtanh.pop %v1018
  %v1023 = vtanh.pop %v1019
  %v1024 = vtanh.pop %v1020
  %v1025 = vtanh.pop %v1021
  %v1026 = vmul.f32 %v1022, 0.5
  %v1027 = vadd.f32 %v1026, 0.5
  %v1028 = vmul.f32 %v1023, 0.5
  %v1029 = vadd.f32 %v1028, 0.5
  %v1030 = vmul.f32 %v1025, 0.5
  %v1031 = vadd.f32 %v1030, 0.5
  %v1032 = vmul.f32 %v1029, %v873
  %v1033 = vmul.f32 %v1027, %v1024
  %v1034 = vadd.f32 %v1032, %v1033
  %v1035 = vtanh.pop %v1034
  %v1036 = vmul.f32 %v1031, %v1035
  %1037 = vmatprep.subr.mxu0 %v390
  %1038 = vmatpush1.msra.mxu0 %v389
  %1039 = vmatprep.subr.mxu0 %v386
  %1040 = vmatpush1.msra.mxu0 %v385
  %1041 = vmatprep.subr.mxu0 %v382
  %1042 = vmatpush1.msra.mxu0 %v381
  %1043 = vmatprep.subr.mxu0 %v378
  %1044 = vmatpush1.msra.mxu0 %v377
  %1045 = vmatprep.subr.mxu0 %v374
  %1046 = vmatpush1.msra.mxu0 %v373
  %1047 = vmatprep.subr.mxu0 %v370
  %1048 = vmatpush1.msra.mxu0 %v369
  %1049 = vmatprep.subr.mxu0 %v366
  %1050 = vmatpush1.msra.mxu0 %v365
  %1051 = vmatprep.subr.mxu0 %v362
  %1052 = vmatpush1.msra.mxu0 %v361
  %1053 = vmatprep.subr.mxu0 %v358
  %1054 = vmatpush1.msra.mxu0 %v357
  %1055 = vmatprep.subr.mxu0 %v354
  %1056 = vmatpush1.msra.mxu0 %v353
  %1057 = vmatprep.subr.mxu0 %v350
  %1058 = vmatpush1.msra.mxu0 %v349
  %1059 = vmatprep.subr.mxu0 %v346
  %1060 = vmatpush1.msra.mxu0 %v345
  %1061 = vmatprep.subr.mxu0 %v342
  %1062 = vmatpush1.msra.mxu0 %v341
  %1063 = vmatprep.subr.mxu0 %v338
  %1064 = vmatpush1.msra.mxu0 %v337
  %1065 = vmatprep.subr.mxu0 %v334
  %1066 = vmatpush1.msra.mxu0 %v333
  %1067 = vmatprep.subr.mxu0 %v330
  %1068 = vmatpush1.msra.mxu0 %v329
  %1069 = vmatprep.subr.mxu0 0.0
  %1070 = vmatpush2.msra.mxu0 0.0
  %1071 = vmatprep.subr.mxu0 0.0
  %1072 = vmatpush2.msra.mxu0 0.0
  %1073 = vmatprep.subr.mxu0 0.0
  %1074 = vmatpush2.msra.mxu0 0.0
  %1075 = vmatprep.subr.mxu0 0.0
  %1076 = vmatpush2.msra.mxu0 0.0
  %1077 = vmatprep.subr.mxu0 0.0
  %1078 = vmatpush2.msra.mxu0 0.0
  %1079 = vmatprep.subr.mxu0 0.0
  %1080 = vmatpush2.msra.mxu0 0.0
  %1081 = vmatprep.subr.mxu0 0.0
  %1082 = vmatpush2.msra.mxu0 0.0
  %1083 = vmatprep.subr.mxu0 0.0
  %1084 = vmatpush2.msra.mxu0 0.0
  %1085 = vmatprep.subr.mxu0 0.0
  %1086 = vmatpush2.msra.mxu0 0.0
  %1087 = vmatprep.subr.mxu0 0.0
  %1088 = vmatpush2.msra.mxu0 0.0
  %1089 = vmatprep.subr.mxu0 0.0
  %1090 = vmatpush2.msra.mxu0 0.0
  %1091 = vmatprep.subr.mxu0 0.0
  %1092 = vmatpush2.msra.mxu0 0.0
  %1093 = vmatprep.subr.mxu0 0.0
  %1094 = vmatpush2.msra.mxu0 0.0
  %1095 = vmatprep.subr.mxu0 0.0
  %1096 = vmatpush2.msra.mxu0 0.0
  %1097 = vmatprep.subr.mxu0 0.0
  %1098 = vmatpush2.msra.mxu0 0.0
  %1099 = vmatprep.subr.mxu0 0.0
  %1100 = vmatpush2.msra.mxu0 0.0
  %1101 = vmatprep.mubr.f32.mxu0 0.0
  %1102 = vmatmul.mubr.f32.gmra.mxu0 %v1036
  %v1103 = vpop.f32.mrf.mxu0
  %v1104 = vadd.f32 0.0, %v1103
  %v1105 = vpop.f32.mrf.mxu0
  %v1106 = vadd.f32 0.0, %v1105
  %1107 = vdwg.mxu0
  %1108 = vmatprep.subr.mxu0 %v392
  %1109 = vmatpush1.msra.mxu0 %v391
  %1110 = vmatprep.subr.mxu0 %v388
  %1111 = vmatpush1.msra.mxu0 %v387
  %1112 = vmatprep.subr.mxu0 %v384
  %1113 = vmatpush1.msra.mxu0 %v383
  %1114 = vmatprep.subr.mxu0 %v380
  %1115 = vmatpush1.msra.mxu0 %v379
  %1116 = vmatprep.subr.mxu0 %v376
  %1117 = vmatpush1.msra.mxu0 %v375
  %1118 = vmatprep.subr.mxu0 %v372
  %1119 = vmatpush1.msra.mxu0 %v371
  %1120 = vmatprep.subr.mxu0 %v368
  %1121 = vmatpush1.msra.mxu0 %v367
  %1122 = vmatprep.subr.mxu0 %v364
  %1123 = vmatpush1.msra.mxu0 %v363
  %1124 = vmatprep.subr.mxu0 %v360
  %1125 = vmatpush1.msra.mxu0 %v359
  %1126 = vmatprep.subr.mxu0 %v356
  %1127 = vmatpush1.msra.mxu0 %v355
  %1128 = vmatprep.subr.mxu0 %v352
  %1129 = vmatpush1.msra.mxu0 %v351
  %1130 = vmatprep.subr.mxu0 %v348
  %1131 = vmatpush1.msra.mxu0 %v347
  %1132 = vmatprep.subr.mxu0 %v344
  %1133 = vmatpush1.msra.mxu0 %v343
  %1134 = vmatprep.subr.mxu0 %v340
  %1135 = vmatpush1.msra.mxu0 %v339
  %1136 = vmatprep.subr.mxu0 %v336
  %1137 = vmatpush1.msra.mxu0 %v335
  %1138 = vmatprep.subr.mxu0 %v332
  %1139 = vmatpush1.msra.mxu0 %v331
  %1140 = vmatprep.subr.mxu0 0.0
  %1141 = vmatpush2.msra.mxu0 0.0
  %1142 = vmatprep.subr.mxu0 0.0
  %1143 = vmatpush2.msra.mxu0 0.0
  %1144 = vmatprep.subr.mxu0 0.0
  %1145 = vmatpush2.msra.mxu0 0.0
  %1146 = vmatprep.subr.mxu0 0.0
  %1147 = vmatpush2.msra.mxu0 0.0
  %1148 = vmatprep.subr.mxu0 0.0
  %1149 = vmatpush2.msra.mxu0 0.0
  %1150 = vmatprep.subr.mxu0 0.0
  %1151 = vmatpush2.msra.mxu0 0.0
  %1152 = vmatprep.subr.mxu0 0.0
  %1153 = vmatpush2.msra.mxu0 0.0
  %1154 = vmatprep.subr.mxu0 0.0
  %1155 = vmatpush2.msra.mxu0 0.0
  %1156 = vmatprep.subr.mxu0 0.0
  %1157 = vmatpush2.msra.mxu0 0.0
  %1158 = vmatprep.subr.mxu0 0.0
  %1159 = vmatpush2.msra.mxu0 0.0
  %1160 = vmatprep.subr.mxu0 0.0
  %1161 = vmatpush2.msra.mxu0 0.0
  %1162 = vmatprep.subr.mxu0 0.0
  %1163 = vmatpush2.msra.mxu0 0.0
  %1164 = vmatprep.subr.mxu0 0.0
  %1165 = vmatpush2.msra.mxu0 0.0
  %1166 = vmatprep.subr.mxu0 0.0
  %1167 = vmatpush2.msra.mxu0 0.0
  %1168 = vmatprep.subr.mxu0 0.0
  %1169 = vmatpush2.msra.mxu0 0.0
  %1170 = vmatprep.subr.mxu0 0.0
  %1171 = vmatpush2.msra.mxu0 0.0
  %1172 = vmatprep.mubr.f32.mxu0 0.0
  %1173 = vmatmul.mubr.f32.gmra.mxu0 %v1036
  %v1174 = vpop.f32.mrf.mxu0
  %v1175 = vadd.f32 0.0, %v1174
  %v1176 = vpop.f32.mrf.mxu0
  %v1177 = vadd.f32 0.0, %v1176
  %1178 = vdwg.mxu0
  %v1179 = vadd.f32 %v238, %v1104
  %v1180 = vadd.f32 %v240, %v1106
  %v1181 = vadd.f32 %v311, %v1175
  %v1182 = vadd.f32 %v313, %v1177
  %v1183 = vtanh.pop %v1179
  %v1184 = vtanh.pop %v1180
  %v1185 = vtanh.pop %v1181
  %v1186 = vtanh.pop %v1182
  %v1187 = vmul.f32 %v1183, 0.5
  %v1188 = vadd.f32 %v1187, 0.5
  %v1189 = vmul.f32 %v1184, 0.5
  %v1190 = vadd.f32 %v1189, 0.5
  %v1191 = vmul.f32 %v1186, 0.5
  %v1192 = vadd.f32 %v1191, 0.5
  %v1193 = vmul.f32 %v1190, %v1034
  %v1194 = vmul.f32 %v1188, %v1185
  %v1195 = vadd.f32 %v1193, %v1194
  %v1196 = vtanh.pop %v1195
  %v1197 = vmul.f32 %v1192, %v1196
  %1198 = vmatprep.subr.mxu0 %v390
  %1199 = vmatpush1.msra.mxu0 %v389
  %1200 = vmatprep.subr.mxu0 %v386
  %1201 = vmatpush1.msra.mxu0 %v385
  %1202 = vmatprep.subr.mxu0 %v382
  %1203 = vmatpush1.msra.mxu0 %v381
  %1204 = vmatprep.subr.mxu0 %v378
  %1205 = vmatpush1.msra.mxu0 %v377
  %1206 = vmatprep.subr.mxu0 %v374
  %1207 = vmatpush1.msra.mxu0 %v373
  %1208 = vmatprep.subr.mxu0 %v370
  %1209 = vmatpush1.msra.mxu0 %v369
  %1210 = vmatprep.subr.mxu0 %v366
  %1211 = vmatpush1.msra.mxu0 %v365
  %1212 = vmatprep.subr.mxu0 %v362
  %1213 = vmatpush1.msra.mxu0 %v361
  %1214 = vmatprep.subr.mxu0 %v358
  %1215 = vmatpush1.msra.mxu0 %v357
  %1216 = vmatprep.subr.mxu0 %v354
  %1217 = vmatpush1.msra.mxu0 %v353
  %1218 = vmatprep.subr.mxu0 %v350
  %1219 = vmatpush1.msra.mxu0 %v349
  %1220 = vmatprep.subr.mxu0 %v346
  %1221 = vmatpush1.msra.mxu0 %v345
  %1222 = vmatprep.subr.mxu0 %v342
  %1223 = vmatpush1.msra.mxu0 %v341
  %1224 = vmatprep.subr.mxu0 %v338
  %1225 = vmatpush1.msra.mxu0 %v337
  %1226 = vmatprep.subr.mxu0 %v334
  %1227 = vmatpush1.msra.mxu0 %v333
  %1228 = vmatprep.subr.mxu0 %v330
  %1229 = vmatpush1.msra.mxu0 %v329
  %1230 = vmatprep.subr.mxu0 0.0
  %1231 = vmatpush2.msra.mxu0 0.0
  %1232 = vmatprep.subr.mxu0 0.0
  %1233 = vmatpush2.msra.mxu0 0.0
  %1234 = vmatprep.subr.mxu0 0.0
  %1235 = vmatpush2.msra.mxu0 0.0
  %1236 = vmatprep.subr.mxu0 0.0
  %1237 = vmatpush2.msra.mxu0 0.0
  %1238 = vmatprep.subr.mxu0 0.0
  %1239 = vmatpush2.msra.mxu0 0.0
  %1240 = vmatprep.subr.mxu0 0.0
  %1241 = vmatpush2.msra.mxu0 0.0
  %1242 = vmatprep.subr.mxu0 0.0
  %1243 = vmatpush2.msra.mxu0 0.0
  %1244 = vmatprep.subr.mxu0 0.0
  %1245 = vmatpush2.msra.mxu0 0.0
  %1246 = vmatprep.subr.mxu0 0.0
  %1247 = vmatpush2.msra.mxu0 0.0
  %1248 = vmatprep.subr.mxu0 0.0
  %1249 = vmatpush2.msra.mxu0 0.0
  %1250 = vmatprep.subr.mxu0 0.0
  %1251 = vmatpush2.msra.mxu0 0.0
  %1252 = vmatprep.subr.mxu0 0.0
  %1253 = vmatpush2.msra.mxu0 0.0
  %1254 = vmatprep.subr.mxu0 0.0
  %1255 = vmatpush2.msra.mxu0 0.0
  %1256 = vmatprep.subr.mxu0 0.0
  %1257 = vmatpush2.msra.mxu0 0.0
  %1258 = vmatprep.subr.mxu0 0.0
  %1259 = vmatpush2.msra.mxu0 0.0
  %1260 = vmatprep.subr.mxu0 0.0
  %1261 = vmatpush2.msra.mxu0 0.0
  %1262 = vmatprep.mubr.f32.mxu0 0.0
  %1263 = vmatmul.mubr.f32.gmra.mxu0 %v1197
  %v1264 = vpop.f32.mrf.mxu0
  %v1265 = vadd.f32 0.0, %v1264
  %v1266 = vpop.f32.mrf.mxu0
  %v1267 = vadd.f32 0.0, %v1266
  %1268 = vdwg.mxu0
  %1269 = vmatprep.subr.mxu0 %v392
  %1270 = vmatpush1.msra.mxu0 %v391
  %1271 = vmatprep.subr.mxu0 %v388
  %1272 = vmatpush1.msra.mxu0 %v387
  %1273 = vmatprep.subr.mxu0 %v384
  %1274 = vmatpush1.msra.mxu0 %v383
  %1275 = vmatprep.subr.mxu0 %v380
  %1276 = vmatpush1.msra.mxu0 %v379
  %1277 = vmatprep.subr.mxu0 %v376
  %1278 = vmatpush1.msra.mxu0 %v375
  %1279 = vmatprep.subr.mxu0 %v372
  %1280 = vmatpush1.msra.mxu0 %v371
  %1281 = vmatprep.subr.mxu0 %v368
  %1282 = vmatpush1.msra.mxu0 %v367
  %1283 = vmatprep.subr.mxu0 %v364
  %1284 = vmatpush1.msra.mxu0 %v363
  %1285 = vmatprep.subr.mxu0 %v360
  %1286 = vmatpush1.msra.mxu0 %v359
  %1287 = vmatprep.subr.mxu0 %v356
  %1288 = vmatpush1.msra.mxu0 %v355
  %1289 = vmatprep.subr.mxu0 %v352
  %1290 = vmatpush1.msra.mxu0 %v351
  %1291 = vmatprep.subr.mxu0 %v348
  %1292 = vmatpush1.msra.mxu0 %v347
  %1293 = vmatprep.subr.mxu0 %v344
  %1294 = vmatpush1.msra.mxu0 %v343
  %1295 = vmatprep.subr.mxu0 %v340
  %1296 = vmatpush1.msra.mxu0 %v339
  %1297 = vmatprep.subr.mxu0 %v336
  %1298 = vmatpush1.msra.mxu0 %v335
  %1299 = vmatprep.subr.mxu0 %v332
  %1300 = vmatpush1.msra.mxu0 %v331
  %1301 = vmatprep.subr.mxu0 0.0
  %1302 = vmatpush2.msra.mxu0 0.0
  %1303 = vmatprep.subr.mxu0 0.0
  %1304 = vmatpush2.msra.mxu0 0.0
  %1305 = vmatprep.subr.mxu0 0.0
  %1306 = vmatpush2.msra.mxu0 0.0
  %1307 = vmatprep.subr.mxu0 0.0
  %1308 = vmatpush2.msra.mxu0 0.0
  %1309 = vmatprep.subr.mxu0 0.0
  %1310 = vmatpush2.msra.mxu0 0.0
  %1311 = vmatprep.subr.mxu0 0.0
  %1312 = vmatpush2.msra.mxu0 0.0
  %1313 = vmatprep.subr.mxu0 0.0
  %1314 = vmatpush2.msra.mxu0 0.0
  %1315 = vmatprep.subr.mxu0 0.0
  %1316 = vmatpush2.msra.mxu0 0.0
  %1317 = vmatprep.subr.mxu0 0.0
  %1318 = vmatpush2.msra.mxu0 0.0
  %1319 = vmatprep.subr.mxu0 0.0
  %1320 = vmatpush2.msra.mxu0 0.0
  %1321 = vmatprep.subr.mxu0 0.0
  %1322 = vmatpush2.msra.mxu0 0.0
  %1323 = vmatprep.subr.mxu0 0.0
  %1324 = vmatpush2.msra.mxu0 0.0
  %1325 = vmatprep.subr.mxu0 0.0
  %1326 = vmatpush2.msra.mxu0 0.0
  %1327 = vmatprep.subr.mxu0 0.0
  %1328 = vmatpush2.msra.mxu0 0.0
  %1329 = vmatprep.subr.mxu0 0.0
  %1330 = vmatpush2.msra.mxu0 0.0
  %1331 = vmatprep.subr.mxu0 0.0
  %1332 = vmatpush2.msra.mxu0 0.0
  %1333 = vmatprep.mubr.f32.mxu0 0.0
  %1334 = vmatmul.mubr.f32.gmra.mxu0 %v1197
  %v1335 = vpop.f32.mrf.mxu0
  %v1336 = vadd.f32 0.0, %v1335
  %v1337 = vpop.f32.mrf.mxu0
  %v1338 = vadd.f32 0.0, %v1337
  %1339 = vdwg.mxu0
  %v1340 = vadd.f32 %v242, %v1265
  %v1341 = vadd.f32 %v244, %v1267
  %v1342 = vadd.f32 %v315, %v1336
  %v1343 = vadd.f32 %v317, %v1338
  %v1344 = vtanh.pop %v1340
  %v1345 = vtanh.pop %v1341
  %v1346 = vtanh.pop %v1342
  %v1347 = vtanh.pop %v1343
  %v1348 = vmul.f32 %v1344, 0.5
  %v1349 = vadd.f32 %v1348, 0.5
  %v1350 = vmul.f32 %v1345, 0.5
  %v1351 = vadd.f32 %v1350, 0.5
  %v1352 = vmul.f32 %v1347, 0.5
  %v1353 = vadd.f32 %v1352, 0.5
  %v1354 = vmul.f32 %v1351, %v1195
  %v1355 = vmul.f32 %v1349, %v1346
  %v1356 = vadd.f32 %v1354, %v1355
  %v1357 = vtanh.pop %v1356
  %v1358 = vmul.f32 %v1353, %v1357
  %1359 = vmatprep.subr.mxu0 %v390
  %1360 = vmatpush1.msra.mxu0 %v389
  %1361 = vmatprep.subr.mxu0 %v386
  %1362 = vmatpush1.msra.mxu0 %v385
  %1363 = vmatprep.subr.mxu0 %v382
  %1364 = vmatpush1.msra.mxu0 %v381
  %1365 = vmatprep.subr.mxu0 %v378
  %1366 = vmatpush1.msra.mxu0 %v377
  %1367 = vmatprep.subr.mxu0 %v374
  %1368 = vmatpush1.msra.mxu0 %v373
  %1369 = vmatprep.subr.mxu0 %v370
  %1370 = vmatpush1.msra.mxu0 %v369
  %1371 = vmatprep.subr.mxu0 %v366
  %1372 = vmatpush1.msra.mxu0 %v365
  %1373 = vmatprep.subr.mxu0 %v362
  %1374 = vmatpush1.msra.mxu0 %v361
  %1375 = vmatprep.subr.mxu0 %v358
  %1376 = vmatpush1.msra.mxu0 %v357
  %1377 = vmatprep.subr.mxu0 %v354
  %1378 = vmatpush1.msra.mxu0 %v353
  %1379 = vmatprep.subr.mxu0 %v350
  %1380 = vmatpush1.msra.mxu0 %v349
  %1381 = vmatprep.subr.mxu0 %v346
  %1382 = vmatpush1.msra.mxu0 %v345
  %1383 = vmatprep.subr.mxu0 %v342
  %1384 = vmatpush1.msra.mxu0 %v341
  %1385 = vmatprep.subr.mxu0 %v338
  %1386 = vmatpush1.msra.mxu0 %v337
  %1387 = vmatprep.subr.mxu0 %v334
  %1388 = vmatpush1.msra.mxu0 %v333
  %1389 = vmatprep.subr.mxu0 %v330
  %1390 = vmatpush1.msra.mxu0 %v329
  %1391 = vmatprep.subr.mxu0 0.0
  %1392 = vmatpush2.msra.mxu0 0.0
  %1393 = vmatprep.subr.mxu0 0.0
  %1394 = vmatpush2.msra.mxu0 0.0
  %1395 = vmatprep.subr.mxu0 0.0
  %1396 = vmatpush2.msra.mxu0 0.0
  %1397 = vmatprep.subr.mxu0 0.0
  %1398 = vmatpush2.msra.mxu0 0.0
  %1399 = vmatprep.subr.mxu0 0.0
  %1400 = vmatpush2.msra.mxu0 0.0
  %1401 = vmatprep.subr.mxu0 0.0
  %1402 = vmatpush2.msra.mxu0 0.0
  %1403 = vmatprep.subr.mxu0 0.0
  %1404 = vmatpush2.msra.mxu0 0.0
  %1405 = vmatprep.subr.mxu0 0.0
  %1406 = vmatpush2.msra.mxu0 0.0
  %1407 = vmatprep.subr.mxu0 0.0
  %1408 = vmatpush2.msra.mxu0 0.0
  %1409 = vmatprep.subr.mxu0 0.0
  %1410 = vmatpush2.msra.mxu0 0.0
  %1411 = vmatprep.subr.mxu0 0.0
  %1412 = vmatpush2.msra.mxu0 0.0
  %1413 = vmatprep.subr.mxu0 0.0
  %1414 = vmatpush2.msra.mxu0 0.0
  %1415 = vmatprep.subr.mxu0 0.0
  %1416 = vmatpush2.msra.mxu0 0.0
  %1417 = vmatprep.subr.mxu0 0.0
  %1418 = vmatpush2.msra.mxu0 0.0
  %1419 = vmatprep.subr.mxu0 0.0
  %1420 = vmatpush2.msra.mxu0 0.0
  %1421 = vmatprep.subr.mxu0 0.0
  %1422 = vmatpush2.msra.mxu0 0.0
  %1423 = vmatprep.mubr.f32.mxu0 0.0
  %1424 = vmatmul.mubr.f32.gmra.mxu0 %v1358
  %v1425 = vpop.f32.mrf.mxu0
  %v1426 = vadd.f32 0.0, %v1425
  %v1427 = vpop.f32.mrf.mxu0
  %v1428 = vadd.f32 0.0, %v1427
  %1429 = vdwg.mxu0
  %1430 = vmatprep.subr.mxu0 %v392
  %1431 = vmatpush1.msra.mxu0 %v391
  %1432 = vmatprep.subr.mxu0 %v388
  %1433 = vmatpush1.msra.mxu0 %v387
  %1434 = vmatprep.subr.mxu0 %v384
  %1435 = vmatpush1.msra.mxu0 %v383
  %1436 = vmatprep.subr.mxu0 %v380
  %1437 = vmatpush1.msra.mxu0 %v379
  %1438 = vmatprep.subr.mxu0 %v376
  %1439 = vmatpush1.msra.mxu0 %v375
  %1440 = vmatprep.subr.mxu0 %v372
  %1441 = vmatpush1.msra.mxu0 %v371
  %1442 = vmatprep.subr.mxu0 %v368
  %1443 = vmatpush1.msra.mxu0 %v367
  %1444 = vmatprep.subr.mxu0 %v364
  %1445 = vmatpush1.msra.mxu0 %v363
  %1446 = vmatprep.subr.mxu0 %v360
  %1447 = vmatpush1.msra.mxu0 %v359
  %1448 = vmatprep.subr.mxu0 %v356
  %1449 = vmatpush1.msra.mxu0 %v355
  %1450 = vmatprep.subr.mxu0 %v352
  %1451 = vmatpush1.msra.mxu0 %v351
  %1452 = vmatprep.subr.mxu0 %v348
  %1453 = vmatpush1.msra.mxu0 %v347
  %1454 = vmatprep.subr.mxu0 %v344
  %1455 = vmatpush1.msra.mxu0 %v343
  %1456 = vmatprep.subr.mxu0 %v340
  %1457 = vmatpush1.msra.mxu0 %v339
  %1458 = vmatprep.subr.mxu0 %v336
  %1459 = vmatpush1.msra.mxu0 %v335
  %1460 = vmatprep.subr.mxu0 %v332
  %1461 = vmatpush1.msra.mxu0 %v331
  %1462 = vmatprep.subr.mxu0 0.0
  %1463 = vmatpush2.msra.mxu0 0.0
  %1464 = vmatprep.subr.mxu0 0.0
  %1465 = vmatpush2.msra.mxu0 0.0
  %1466 = vmatprep.subr.mxu0 0.0
  %1467 = vmatpush2.msra.mxu0 0.0
  %1468 = vmatprep.subr.mxu0 0.0
  %1469 = vmatpush2.msra.mxu0 0.0
  %1470 = vmatprep.subr.mxu0 0.0
  %1471 = vmatpush2.msra.mxu0 0.0
  %1472 = vmatprep.subr.mxu0 0.0
  %1473 = vmatpush2.msra.mxu0 0.0
  %1474 = vmatprep.subr.mxu0 0.0
  %1475 = vmatpush2.msra.mxu0 0.0
  %1476 = vmatprep.subr.mxu0 0.0
  %1477 = vmatpush2.msra.mxu0 0.0
  %1478 = vmatprep.subr.mxu0 0.0
  %1479 = vmatpush2.msra.mxu0 0.0
  %1480 = vmatprep.subr.mxu0 0.0
  %1481 = vmatpush2.msra.mxu0 0.0
  %1482 = vmatprep.subr.mxu0 0.0
  %1483 = vmatpush2.msra.mxu0 0.0
  %1484 = vmatprep.subr.mxu0 0.0
  %1485 = vmatpush2.msra.mxu0 0.0
  %1486 = vmatprep.subr.mxu0 0.0
  %1487 = vmatpush2.msra.mxu0 0.0
  %1488 = vmatprep.subr.mxu0 0.0
  %1489 = vmatpush2.msra.mxu0 0.0
  %1490 = vmatprep.subr.mxu0 0.0
  %1491 = vmatpush2.msra.mxu0 0.0
  %1492 = vmatprep.subr.mxu0 0.0
  %1493 = vmatpush2.msra.mxu0 0.0
  %1494 = vmatprep.mubr.f32.mxu0 0.0
  %1495 = vmatmul.mubr.f32.gmra.mxu0 %v1358
  %v1496 = vpop.f32.mrf.mxu0
  %v1497 = vadd.f32 0.0, %v1496
  %v1498 = vpop.f32.mrf.mxu0
  %v1499 = vadd.f32 0.0, %v1498
  %1500 = vdwg.mxu0
  %v1501 = vadd.f32 %v248, %v1426
  %v1502 = vadd.f32 %v250, %v1428
  %v1503 = vadd.f32 %v321, %v1497
  %v1504 = vadd.f32 %v323, %v1499
  %v1505 = vtanh.pop %v1501
  %v1506 = vtanh.pop %v1502
  %v1507 = vtanh.pop %v1503
  %v1508 = vtanh.pop %v1504
  %v1509 = vmul.f32 %v1505, 0.5
  %v1510 = vadd.f32 %v1509, 0.5
  %v1511 = vmul.f32 %v1506, 0.5
  %v1512 = vadd.f32 %v1511, 0.5
  %v1513 = vmul.f32 %v1508, 0.5
  %v1514 = vadd.f32 %v1513, 0.5
  %v1515 = vmul.f32 %v1512, %v1356
  %v1516 = vmul.f32 %v1510, %v1507
  %v1517 = vadd.f32 %v1515, %v1516
  %v1518 = vtanh.pop %v1517
  %v1519 = vmul.f32 %v1514, %v1518
  %1520 = vmatprep.subr.mxu0 %v390
  %1521 = vmatpush1.msra.mxu0 %v389
  %1522 = vmatprep.subr.mxu0 %v386
  %1523 = vmatpush1.msra.mxu0 %v385
  %1524 = vmatprep.subr.mxu0 %v382
  %1525 = vmatpush1.msra.mxu0 %v381
  %1526 = vmatprep.subr.mxu0 %v378
  %1527 = vmatpush1.msra.mxu0 %v377
  %1528 = vmatprep.subr.mxu0 %v374
  %1529 = vmatpush1.msra.mxu0 %v373
  %1530 = vmatprep.subr.mxu0 %v370
  %1531 = vmatpush1.msra.mxu0 %v369
  %1532 = vmatprep.subr.mxu0 %v366
  %1533 = vmatpush1.msra.mxu0 %v365
  %1534 = vmatprep.subr.mxu0 %v362
  %1535 = vmatpush1.msra.mxu0 %v361
  %1536 = vmatprep.subr.mxu0 %v358
  %1537 = vmatpush1.msra.mxu0 %v357
  %1538 = vmatprep.subr.mxu0 %v354
  %1539 = vmatpush1.msra.mxu0 %v353
  %1540 = vmatprep.subr.mxu0 %v350
  %1541 = vmatpush1.msra.mxu0 %v349
  %1542 = vmatprep.subr.mxu0 %v346
  %1543 = vmatpush1.msra.mxu0 %v345
  %1544 = vmatprep.subr.mxu0 %v342
  %1545 = vmatpush1.msra.mxu0 %v341
  %1546 = vmatprep.subr.mxu0 %v338
  %1547 = vmatpush1.msra.mxu0 %v337
  %1548 = vmatprep.subr.mxu0 %v334
  %1549 = vmatpush1.msra.mxu0 %v333
  %1550 = vmatprep.subr.mxu0 %v330
  %1551 = vmatpush1.msra.mxu0 %v329
  %1552 = vmatprep.subr.mxu0 0.0
  %1553 = vmatpush2.msra.mxu0 0.0
  %1554 = vmatprep.subr.mxu0 0.0
  %1555 = vmatpush2.msra.mxu0 0.0
  %1556 = vmatprep.subr.mxu0 0.0
  %1557 = vmatpush2.msra.mxu0 0.0
  %1558 = vmatprep.subr.mxu0 0.0
  %1559 = vmatpush2.msra.mxu0 0.0
  %1560 = vmatprep.subr.mxu0 0.0
  %1561 = vmatpush2.msra.mxu0 0.0
  %1562 = vmatprep.subr.mxu0 0.0
  %1563 = vmatpush2.msra.mxu0 0.0
  %1564 = vmatprep.subr.mxu0 0.0
  %1565 = vmatpush2.msra.mxu0 0.0
  %1566 = vmatprep.subr.mxu0 0.0
  %1567 = vmatpush2.msra.mxu0 0.0
  %1568 = vmatprep.subr.mxu0 0.0
  %1569 = vmatpush2.msra.mxu0 0.0
  %1570 = vmatprep.subr.mxu0 0.0
  %1571 = vmatpush2.msra.mxu0 0.0
  %1572 = vmatprep.subr.mxu0 0.0
  %1573 = vmatpush2.msra.mxu0 0.0
  %1574 = vmatprep.subr.mxu0 0.0
  %1575 = vmatpush2.msra.mxu0 0.0
  %1576 = vmatprep.subr.mxu0 0.0
  %1577 = vmatpush2.msra.mxu0 0.0
  %1578 = vmatprep.subr.mxu0 0.0
  %1579 = vmatpush2.msra.mxu0 0.0
  %1580 = vmatprep.subr.mxu0 0.0
  %1581 = vmatpush2.msra.mxu0 0.0
  %1582 = vmatprep.subr.mxu0 0.0
  %1583 = vmatpush2.msra.mxu0 0.0
  %1584 = vmatprep.mubr.f32.mxu0 0.0
  %1585 = vmatmul.mubr.f32.gmra.mxu0 %v1519
  %v1586 = vpop.f32.mrf.mxu0
  %v1587 = vadd.f32 0.0, %v1586
  %v1588 = vpop.f32.mrf.mxu0
  %v1589 = vadd.f32 0.0, %v1588
  %1590 = vdwg.mxu0
  %1591 = vmatprep.subr.mxu0 %v392
  %1592 = vmatpush1.msra.mxu0 %v391
  %1593 = vmatprep.subr.mxu0 %v388
  %1594 = vmatpush1.msra.mxu0 %v387
  %1595 = vmatprep.subr.mxu0 %v384
  %1596 = vmatpush1.msra.mxu0 %v383
  %1597 = vmatprep.subr.mxu0 %v380
  %1598 = vmatpush1.msra.mxu0 %v379
  %1599 = vmatprep.subr.mxu0 %v376
  %1600 = vmatpush1.msra.mxu0 %v375
  %1601 = vmatprep.subr.mxu0 %v372
  %1602 = vmatpush1.msra.mxu0 %v371
  %1603 = vmatprep.subr.mxu0 %v368
  %1604 = vmatpush1.msra.mxu0 %v367
  %1605 = vmatprep.subr.mxu0 %v364
  %1606 = vmatpush1.msra.mxu0 %v363
  %1607 = vmatprep.subr.mxu0 %v360
  %1608 = vmatpush1.msra.mxu0 %v359
  %1609 = vmatprep.subr.mxu0 %v356
  %1610 = vmatpush1.msra.mxu0 %v355
  %1611 = vmatprep.subr.mxu0 %v352
  %1612 = vmatpush1.msra.mxu0 %v351
  %1613 = vmatprep.subr.mxu0 %v348
  %1614 = vmatpush1.msra.mxu0 %v347
  %1615 = vmatprep.subr.mxu0 %v344
  %1616 = vmatpush1.msra.mxu0 %v343
  %1617 = vmatprep.subr.mxu0 %v340
  %1618 = vmatpush1.msra.mxu0 %v339
  %1619 = vmatprep.subr.mxu0 %v336
  %1620 = vmatpush1.msra.mxu0 %v335
  %1621 = vmatprep.subr.mxu0 %v332
  %1622 = vmatpush1.msra.mxu0 %v331
  %1623 = vmatprep.subr.mxu0 0.0
  %1624 = vmatpush2.msra.mxu0 0.0
  %1625 = vmatprep.subr.mxu0 0.0
  %1626 = vmatpush2.msra.mxu0 0.0
  %1627 = vmatprep.subr.mxu0 0.0
  %1628 = vmatpush2.msra.mxu0 0.0
  %1629 = vmatprep.subr.mxu0 0.0
  %1630 = vmatpush2.msra.mxu0 0.0
  %1631 = vmatprep.subr.mxu0 0.0
  %1632 = vmatpush2.msra.mxu0 0.0
  %1633 = vmatprep.subr.mxu0 0.0
  %1634 = vmatpush2.msra.mxu0 0.0
  %1635 = vmatprep.subr.mxu0 0.0
  %1636 = vmatpush2.msra.mxu0 0.0
  %1637 = vmatprep.subr.mxu0 0.0
  %1638 = vmatpush2.msra.mxu0 0.0
  %1639 = vmatprep.subr.mxu0 0.0
  %1640 = vmatpush2.msra.mxu0 0.0
  %1641 = vmatprep.subr.mxu0 0.0
  %1642 = vmatpush2.msra.mxu0 0.0
  %1643 = vmatprep.subr.mxu0 0.0
  %1644 = vmatpush2.msra.mxu0 0.0
  %1645 = vmatprep.subr.mxu0 0.0
  %1646 = vmatpush2.msra.mxu0 0.0
  %1647 = vmatprep.subr.mxu0 0.0
  %1648 = vmatpush2.msra.mxu0 0.0
  %1649 = vmatprep.subr.mxu0 0.0
  %1650 = vmatpush2.msra.mxu0 0.0
  %1651 = vmatprep.subr.mxu0 0.0
  %1652 = vmatpush2.msra.mxu0 0.0
  %1653 = vmatprep.subr.mxu0 0.0
  %1654 = vmatpush2.msra.mxu0 0.0
  %1655 = vmatprep.mubr.f32.mxu0 0.0
  %1656 = vmatmul.mubr.f32.gmra.mxu0 %v1519
  %v1657 = vpop.f32.mrf.mxu0
  %v1658 = vadd.f32 0.0, %v1657
  %v1659 = vpop.f32.mrf.mxu0
  %v1660 = vadd.f32 0.0, %v1659
  %1661 = vdwg.mxu0
  %v1662 = vadd.f32 %v252, %v1587
  %v1663 = vadd.f32 %v254, %v1589
  %v1664 = vadd.f32 %v325, %v1658
  %v1665 = vadd.f32 %v327, %v1660
  %v1666 = vtanh.pop %v1662
  %v1667 = vtanh.pop %v1663
  %v1668 = vtanh.pop %v1664
  %v1669 = vtanh.pop %v1665
  %v1670 = vmul.f32 %v1666, 0.5
  %v1671 = vadd.f32 %v1670, 0.5
  %v1672 = vmul.f32 %v1667, 0.5
  %v1673 = vadd.f32 %v1672, 0.5
  %v1674 = vmul.f32 %v1669, 0.5
  %v1675 = vadd.f32 %v1674, 0.5
  %v1676 = vmul.f32 %v1673, %v1517
  %v1677 = vmul.f32 %v1671, %v1668
  %v1678 = vadd.f32 %v1676, %v1677
  %v1679 = vtanh.pop %v1678
  %v1680 = vmul.f32 %v1675, %v1679
  %v1681 = vld [vmem:[%s4] sm:$0xff]
  %v1682 = vld [vmem:[%s4 + $0x8] sm:$0xff]
  %v1683 = vld [vmem:[%s4 + $0x10] sm:$0xff]
  %v1684 = vld [vmem:[%s4 + $0x18] sm:$0xff]
  %v1685 = vld [vmem:[%s4 + $0x20] sm:$0xff]
  %v1686 = vld [vmem:[%s4 + $0x28] sm:$0xff]
  %v1687 = vld [vmem:[%s4 + $0x30] sm:$0xff]
  %v1688 = vld [vmem:[%s4 + $0x38] sm:$0xff]
  %v1689 = vld [vmem:[%s4 + $0x40] sm:$0xff]
  %v1690 = vld [vmem:[%s4 + $0x48] sm:$0xff]
  %v1691 = vld [vmem:[%s4 + $0x50] sm:$0xff]
  %v1692 = vld [vmem:[%s4 + $0x58] sm:$0xff]
  %v1693 = vld [vmem:[%s4 + $0x60] sm:$0xff]
  %v1694 = vld [vmem:[%s4 + $0x68] sm:$0xff]
  %v1695 = vld [vmem:[%s4 + $0x70] sm:$0xff]
  %v1696 = vld [vmem:[%s4 + $0x78] sm:$0xff]
  %v1697 = vld [vmem:[%s5] sm:$0x1]
  %v1699 = vlaneseq
  %v1700 = vshrl.u32 %v1699, 7
  %v1701 = vsub.s32 0, %v1700
  %v1702 = vrot.slane %v1697, %v1701
  %1704 = vmatprep.subr.mxu0 0.0
  %1705 = vmatpush1.msra.mxu0 %v1696
  %1706 = vmatprep.subr.mxu0 0.0
  %1707 = vmatpush1.msra.mxu0 %v1695
  %1708 = vmatprep.subr.mxu0 0.0
  %1709 = vmatpush1.msra.mxu0 %v1694
  %1710 = vmatprep.subr.mxu0 0.0
  %1711 = vmatpush1.msra.mxu0 %v1693
  %1712 = vmatprep.subr.mxu0 0.0
  %1713 = vmatpush1.msra.mxu0 %v1692
  %1714 = vmatprep.subr.mxu0 0.0
  %1715 = vmatpush1.msra.mxu0 %v1691
  %1716 = vmatprep.subr.mxu0 0.0
  %1717 = vmatpush1.msra.mxu0 %v1690
  %1718 = vmatprep.subr.mxu0 0.0
  %1719 = vmatpush1.msra.mxu0 %v1689
  %1720 = vmatprep.subr.mxu0 0.0
  %1721 = vmatpush1.msra.mxu0 %v1688
  %1722 = vmatprep.subr.mxu0 0.0
  %1723 = vmatpush1.msra.mxu0 %v1687
  %1724 = vmatprep.subr.mxu0 0.0
  %1725 = vmatpush1.msra.mxu0 %v1686
  %1726 = vmatprep.subr.mxu0 0.0
  %1727 = vmatpush1.msra.mxu0 %v1685
  %1728 = vmatprep.subr.mxu0 0.0
  %1729 = vmatpush1.msra.mxu0 %v1684
  %1730 = vmatprep.subr.mxu0 0.0
  %1731 = vmatpush1.msra.mxu0 %v1683
  %1732 = vmatprep.subr.mxu0 0.0
  %1733 = vmatpush1.msra.mxu0 %v1682
  %1734 = vmatprep.subr.mxu0 0.0
  %1735 = vmatpush1.msra.mxu0 %v1681
  %1736 = vmatprep.subr.mxu0 0.0
  %1737 = vmatpush2.msra.mxu0 0.0
  %1738 = vmatprep.subr.mxu0 0.0
  %1739 = vmatpush2.msra.mxu0 0.0
  %1740 = vmatprep.subr.mxu0 0.0
  %1741 = vmatpush2.msra.mxu0 0.0
  %1742 = vmatprep.subr.mxu0 0.0
  %1743 = vmatpush2.msra.mxu0 0.0
  %1744 = vmatprep.subr.mxu0 0.0
  %1745 = vmatpush2.msra.mxu0 0.0
  %1746 = vmatprep.subr.mxu0 0.0
  %1747 = vmatpush2.msra.mxu0 0.0
  %1748 = vmatprep.subr.mxu0 0.0
  %1749 = vmatpush2.msra.mxu0 0.0
  %1750 = vmatprep.subr.mxu0 0.0
  %1751 = vmatpush2.msra.mxu0 0.0
  %1752 = vmatprep.subr.mxu0 0.0
  %1753 = vmatpush2.msra.mxu0 0.0
  %1754 = vmatprep.subr.mxu0 0.0
  %1755 = vmatpush2.msra.mxu0 0.0
  %1756 = vmatprep.subr.mxu0 0.0
  %1757 = vmatpush2.msra.mxu0 0.0
  %1758 = vmatprep.subr.mxu0 0.0
  %1759 = vmatpush2.msra.mxu0 0.0
  %1760 = vmatprep.subr.mxu0 0.0
  %1761 = vmatpush2.msra.mxu0 0.0
  %1762 = vmatprep.subr.mxu0 0.0
  %1763 = vmatpush2.msra.mxu0 0.0
  %1764 = vmatprep.subr.mxu0 0.0
  %1765 = vmatpush2.msra.mxu0 0.0
  %1766 = vmatprep.subr.mxu0 0.0
  %1767 = vmatpush2.msra.mxu0 0.0
  %1768 = vmatprep.mubr.f32.mxu0 0.0
  %1769 = vmatmul.mubr.f32.gmra.mxu0 %v1680
  %v1770 = vpop.f32.mrf.mxu0
  %v1771 = vadd.f32 %v1702, %v1770
  %v1772 = vpop.f32.mrf.mxu0
  %1773 = vdwg.mxu0
  %vm1774 = vcmask 15360
  %1775 = vst.msk [vmem:[%s6] sm:$0xff] %vm1774, %v1771
  // Predicated region
  $region26: #{ram_lstm_forward.1} parent=0 // pred_check
    _
  $region27: #{ram_lstm_forward.1} parent=0 // pred_check_branch
    %1777 = sbr.rel (0) target = $region29
  $region28: #{ram_lstm_forward.1} parent=0 // pred_region
    _
  $region29: #{ram_lstm_forward.1} parent=0 // pred_fallthru
    _
  // Predicated region
  $region30: #{ram_lstm_forward.1} parent=0 // pred_check
    _
  $region31: #{ram_lstm_forward.1} parent=0 // pred_check_branch
    %1779 = sbr.rel (0) target = $region33
  $region32: #{ram_lstm_forward.1} parent=0 // pred_region
    _
  $region33: #{ram_lstm_forward.1} parent=0 // pred_fallthru
    _

</llo_original>
